<compile_context>
chip_gen: v7x
topology: tpu7x:2x2x1
jax: 0.10.0
libtpu: 0.0.40
codegen_flags: <defaults>
</compile_context>

<pallas_src>
import collections
import functools

import jax
import jax.numpy as jnp
from jax.experimental import pallas as pl
from jax.experimental.pallas import tpu as pltpu

LANE = 128
BN_EPS = 1e-5
LRELU_SLOPE = 0.2

ConvMeta = collections.namedtuple("ConvMeta", ["kh", "kw", "k", "cout"])


def _tpu_config():
    """Pick (vmem_limit_bytes, max M-tile rows) per TPU generation."""
    vmem_cap = 64 * 1024 * 1024
    try:
        info = pltpu.get_tpu_info()
        vmem_cap = int(getattr(info, "vmem_capacity_bytes", vmem_cap))
    except Exception:
        pass
    if vmem_cap >= 100 * 1024 * 1024:      # v5e / v6e: 128 MiB physical VMEM
        return 96 * 1024 * 1024, 2048
    return 48 * 1024 * 1024, 1024          # v7x: 64 MiB physical VMEM


VMEM_LIMIT, TM_MAX = _tpu_config()


def _round_up(x, m):
    return (x + m - 1) // m * m


def _pick_tm(m):
    # Either TM_MAX, or the full (16-aligned) M extent for small layers.
    return min(TM_MAX, _round_up(m, 16))


# ----------------------------- Pallas kernels --------------------------------
def _gemm_act_kernel(x_ref, w_ref, o_ref, *, leaky):
    # bf16 x bf16 -> f32 accumulate on the MXU; epilogue in f32.
    y = jnp.dot(x_ref[...], w_ref[...], preferred_element_type=jnp.float32)
    if leaky:
        y = jnp.where(y >= 0, y, LRELU_SLOPE * y)
    o_ref[...] = y.astype(o_ref.dtype)


def gemm_act(patches, w2d, *, tm, leaky):
    """(Mp, Kp) @ (Kp, CoutP) + optional LeakyReLU, tiled over M."""
    mp, kp = patches.shape
    coutp = w2d.shape[1]
    # NOTE: a single-buffered RHS (pipeline_mode=pl.Buffered(1)) would reclaim
    # VMEM on v7x; omitted here to keep lowering maximally portable.
    return pl.pallas_call(
        functools.partial(_gemm_act_kernel, leaky=leaky),
        out_shape=jax.ShapeDtypeStruct((mp, coutp), jnp.bfloat16),
        grid=(mp // tm,),
        in_specs=[pl.BlockSpec((tm, kp), lambda i: (i, 0)),
                  pl.BlockSpec((kp, coutp), lambda i: (0, 0))],
        out_specs=pl.BlockSpec((tm, coutp), lambda i: (i, 0)),
        compiler_params=pltpu.CompilerParams(
            dimension_semantics=("parallel",),
            vmem_limit_bytes=VMEM_LIMIT),
    )(patches, w2d)


def _gemm_stats_kernel(x_ref, w_ref, y_ref, st_ref):
    # GEMM in f32, store the activation intermediate in bf16 (halves HBM
    # traffic of the BN intermediate); stats come from the f32 accumulator.
    y = jnp.dot(x_ref[...], w_ref[...], preferred_element_type=jnp.float32)
    y_ref[...] = y.astype(y_ref.dtype)

    # Zero-padded M rows contribute exactly 0 to both sums, so no masking is
    # needed (the mean/var divide by the true M outside the kernel).
    s1 = jnp.sum(y, axis=0, keepdims=True)            # (1, CoutP)
    s2 = jnp.sum(y * y, axis=0, keepdims=True)        # (1, CoutP)
    pad = jnp.zeros((6, s1.shape[1]), jnp.float32)    # pad sublanes to 8
    st_ref[...] = jnp.concatenate([s1, s2, pad], axis=0)[None]


def gemm_stats(patches, w2d, *, tm):
    """Pass 1 of BN layers: bf16 GEMM output + per-tile [sum; sumsq] partials.

    Each M-tile writes its own stats block -> no cross-tile accumulation in
    the kernel, so the M axis is "parallel" (megacore-shardable on v7x).
    """
    mp, kp = patches.shape
    coutp = w2d.shape[1]
    nt = mp // tm
    return pl.pallas_call(
        _gemm_stats_kernel,
        out_shape=(jax.ShapeDtypeStruct((mp, coutp), jnp.bfloat16),
                   jax.ShapeDtypeStruct((nt, 8, coutp), jnp.float32)),
        grid=(nt,),
        in_specs=[pl.BlockSpec((tm, kp), lambda i: (i, 0)),
                  pl.BlockSpec((kp, coutp), lambda i: (0, 0))],
        out_specs=(pl.BlockSpec((tm, coutp), lambda i: (i, 0)),
                   pl.BlockSpec((1, 8, coutp), lambda i: (i, 0, 0))),
        compiler_params=pltpu.CompilerParams(
            dimension_semantics=("parallel",),
            vmem_limit_bytes=VMEM_LIMIT),
    )(patches, w2d)


def _bn_act_kernel(y_ref, sc_ref, sh_ref, o_ref):
    y = y_ref[...].astype(jnp.float32) * sc_ref[...] + sh_ref[...]
    o_ref[...] = jnp.where(y >= 0, y, LRELU_SLOPE * y).astype(o_ref.dtype)


def bn_act(y, scale, shift, *, tm):
    """Pass 2 of BN layers: y*scale + shift, LeakyReLU(0.2), tiled over M."""
    mp, coutp = y.shape
    return pl.pallas_call(
        _bn_act_kernel,
        out_shape=jax.ShapeDtypeStruct((mp, coutp), jnp.bfloat16),
        grid=(mp // tm,),
        in_specs=[pl.BlockSpec((tm, coutp), lambda i: (i, 0)),
                  pl.BlockSpec((1, coutp), lambda i: (0, 0)),
                  pl.BlockSpec((1, coutp), lambda i: (0, 0))],
        out_specs=pl.BlockSpec((tm, coutp), lambda i: (i, 0)),
        compiler_params=pltpu.CompilerParams(
            dimension_semantics=("parallel",),
            vmem_limit_bytes=VMEM_LIMIT),
    )(y, scale, shift)


# ------------------------------- JAX glue ------------------------------------
def im2col_nhwc(x, kh, kw, stride, pad):
    """x: (N, H, W, C) -> patch matrix (N*OH*OW, kh*kw*C), plus OH, OW."""
    n, h, w, c = x.shape
    if pad > 0:
        x = jnp.pad(x, ((0, 0), (pad, pad), (pad, pad), (0, 0)))
    oh = (h + 2 * pad - kh) // stride + 1
    ow = (w + 2 * pad - kw) // stride + 1
    cols = []
    for i in range(kh):
        for j in range(kw):
            cols.append(x[:, i:i + stride * oh:stride, j:j + stride * ow:stride, :])
    cols = jnp.stack(cols, axis=3)               # (N, OH, OW, kh*kw, C)
    return cols.reshape(n * oh * ow, kh * kw * c), oh, ow


def conv_block(x_nhwc, lp, lm, *, stride, pad, use_bn):
    """Conv2d(bias=False) [+ BatchNorm2d(train)] + LeakyReLU(0.2), NHWC."""
    n = x_nhwc.shape[0]
    patches, oh, ow = im2col_nhwc(x_nhwc, lm.kh, lm.kw, stride, pad)
    m, k = patches.shape
    kp, coutp = lp["w2d"].shape
    tm = _pick_tm(m)
    mp = _round_up(m, tm)
    patches = jnp.pad(patches, ((0, mp - m), (0, kp - k))).astype(jnp.bfloat16)

    if use_bn:
        y, stats = gemm_stats(patches, lp["w2d"], tm=tm)
        stats = stats.sum(axis=0)                 # (8, CoutP): row0=sum, row1=sumsq
        mean = stats[0:1] / m
        var = jnp.maximum(stats[1:2] / m - mean * mean, 0.0)   # biased var, clamped
        scale = lp["gamma"] * jax.lax.rsqrt(var + BN_EPS)
        shift = lp["beta"] - mean * scale
        y = bn_act(y, scale, shift, tm=tm)
    else:
        y = gemm_act(patches, lp["w2d"], tm=tm, leaky=True)

    return y[:m, :lm.cout].reshape(n, oh, ow, lm.cout)


def init_params(key, nc, ndf, num_classes):
    """Raw parameters in PyTorch layout (Cout, Cin, kh, kw), f32."""
    k1, k2, k3, k4, k5 = jax.random.split(key, 5)
    std = 0.02
    f32 = jnp.float32
    return {
        "w1": std * jax.random.normal(k1, (ndf, nc, 4, 4), f32),
        "w2": std * jax.random.normal(k2, (ndf * 2, ndf, 4, 4), f32),
        "g2": jnp.ones((ndf * 2,), f32), "b2": jnp.zeros((ndf * 2,), f32),
        "w3": std * jax.random.normal(k3, (ndf * 4, ndf * 2, 4, 4), f32),
        "g3": jnp.ones((ndf * 4,), f32), "b3": jnp.zeros((ndf * 4,), f32),
        "w4": std * jax.random.normal(k4, (ndf * 8, ndf * 4, 4, 4), f32),
        "g4": jnp.ones((ndf * 8,), f32), "b4": jnp.zeros((ndf * 8,), f32),
        "w5": std * jax.random.normal(k5, (num_classes, ndf * 8, 2, 2), f32),
    }


def prepare_params(raw):
    """One-time prep: (K, Cout) layout, 128-padding, bf16 cast, affine pad.

    Returns (params: pytree of arrays, meta: hashable static layer metadata).
    """
    params, meta = {}, {}
    for name in ("w1", "w2", "w3", "w4"):
        w = raw[name]
        cout, cin, kh, kw = w.shape
        k = kh * kw * cin
        kp, coutp = _round_up(k, LANE), _round_up(cout, LANE)
        w2d = w.transpose(2, 3, 1, 0).reshape(k, cout)        # (kh,kw,Cin) rows
        w2d = jnp.pad(w2d, ((0, kp - k), (0, coutp - cout))).astype(jnp.bfloat16)
        params[name] = {"w2d": w2d}
        meta[name] = ConvMeta(kh, kw, k, cout)

    for idx in (2, 3, 4):
        coutp = params[f"w{idx}"]["w2d"].shape[1]
        c = raw[f"g{idx}"].shape[0]
        params[f"w{idx}"]["gamma"] = jnp.pad(
            raw[f"g{idx}"], (0, coutp - c), constant_values=1.0).reshape(1, coutp)
        params[f"w{idx}"]["beta"] = jnp.pad(
            raw[f"b{idx}"], (0, coutp - c)).reshape(1, coutp)

    # Final conv (2x2 -> 1x1 output): (N, num_classes) is below the (8,128)
    # tile minimum, so it stays in plain XLA as a tiny matmul.
    w5 = raw["w5"]
    cout5, cin5, kh5, kw5 = w5.shape
    params["w5_2d"] = w5.transpose(2, 3, 1, 0).reshape(kh5 * kw5 * cin5, cout5)
    meta["w5"] = ConvMeta(kh5, kw5, kh5 * kw5 * cin5, cout5)

    meta_t = tuple(sorted(meta.items()))          # hashable -> static under jit
    return params, meta_t


@functools.partial(jax.jit, static_argnames=("meta", "num_classes"))
def netd_forward(x_nchw, params, meta, num_classes):
    md = dict(meta)
    # single layout change at the boundary; NHWC (channels on lanes) after this
    x = jnp.transpose(x_nchw, (0, 2, 3, 1)).astype(jnp.bfloat16)

    h = conv_block(x, params["w1"], md["w1"], stride=2, pad=1, use_bn=False)
    h = conv_block(h, params["w2"], md["w2"], stride=2, pad=1, use_bn=True)
    h = conv_block(h, params["w3"], md["w3"], stride=2, pad=1, use_bn=True)
    h = conv_block(h, params["w4"], md["w4"], stride=2, pad=1, use_bn=True)

    # Final Conv2d(ndf*8 -> num_classes, 2, 1, 0): per-sample linear, left to XLA.
    m5 = md["w5"]
    patches, _, _ = im2col_nhwc(h.astype(jnp.float32), m5.kh, m5.kw, 1, 0)
    logits = jnp.dot(patches, params["w5_2d"], preferred_element_type=jnp.float32)
    out = logits.reshape(x.shape[0], num_classes)   # mirrors output.view(N, C)
    if num_classes == 1:
        out = jax.nn.sigmoid(out)                   # nn.Sigmoid 'prob' module
        out = out[:, 0]                             # .squeeze(1)
    return out


if __name__ == "__main__":
    key = jax.random.PRNGKey(0)
    nc, ndf, num_classes, batch = 3, 8, 1, 2        # 32x32 input => 1x1 logits
    kx, kp_ = jax.random.split(key)
    x = jax.random.normal(kx, (batch, nc, 32, 32), jnp.float32)
    raw = init_params(kp_, nc, ndf, num_classes)
    params, meta = prepare_params(raw)

    out = jax.block_until_ready(
        netd_forward(x, params, meta=meta, num_classes=num_classes))
    assert out.shape == (batch,)
    assert bool(jnp.all(jnp.isfinite(out)))
    assert bool(jnp.all((out >= 0.0) & (out <= 1.0)))   # sigmoid range
    print("KERNEL_OK")
</pallas_src>

<mosaic_0001>
module attributes {stable_mosaic.version = 11 : i64} {
  func.func @_gemm_act_kernel(%arg0: i32, %arg1: memref<512x128xbf16, #tpu.memory_space<vmem>>, %arg2: memref<128x128xbf16, #tpu.memory_space<vmem>>, %arg3: memref<512x128xbf16, #tpu.memory_space<vmem>>) attributes {dimension_semantics = [#tpu.dimension_semantics<parallel>], iteration_bounds = array<i64: 1>, scalar_prefetch = 0 : i64, scratch_operands = 0 : i64, tpu.core_type = #tpu.core_type<tc>, window_params = [{transform_indices = @transform_0, window_bounds = array<i64: 512, 128>}, {pipeline_mode = #tpu.pipeline_mode<synchronous>, transform_indices = @transform_1, window_bounds = array<i64: 128, 128>}, {transform_indices = @transform_2, window_bounds = array<i64: 512, 128>}]} {
    %c0 = arith.constant 0 : index
    %c0_0 = arith.constant 0 : index
    %0 = vector.load %arg1[%c0, %c0_0] : memref<512x128xbf16, #tpu.memory_space<vmem>>, vector<512x128xbf16>
    %c0_1 = arith.constant 0 : index
    %c0_2 = arith.constant 0 : index
    %1 = vector.load %arg2[%c0_1, %c0_2] : memref<128x128xbf16, #tpu.memory_space<vmem>>, vector<128x128xbf16>
    %cst = arith.constant dense<0.000000e+00> : vector<512x128xf32>
    %2 = tpu.matmul %0, %1, %cst {dimension_numbers = #tpu.dot_dimension_numbers<[1], [0], [0], [1], [0, 0, 1, 1], [], []>} : vector<512x128xbf16>, vector<128x128xbf16>, vector<512x128xf32> -> vector<512x128xf32>
    %cst_3 = arith.constant 0.000000e+00 : f32
    %3 = vector.broadcast %cst_3 : f32 to vector<512x128xf32>
    %4 = arith.cmpf oge, %2, %3 : vector<512x128xf32>
    %cst_4 = arith.constant 2.000000e-01 : f32
    %5 = vector.broadcast %cst_4 : f32 to vector<512x128xf32>
    %6 = arith.mulf %5, %2 : vector<512x128xf32>
    %7 = arith.select %4, %2, %6 : vector<512x128xi1>, vector<512x128xf32>
    %8 = arith.truncf %7 : vector<512x128xf32> to vector<512x128xbf16>
    %c0_5 = arith.constant 0 : index
    %c0_6 = arith.constant 0 : index
    %9 = vector.load %arg3[%c0_5, %c0_6] : memref<512x128xbf16, #tpu.memory_space<vmem>>, vector<512x128xbf16>
    tpu.vector_store %arg3[%c0_5, %c0_6], %8 {strides = array<i32>} : memref<512x128xbf16, #tpu.memory_space<vmem>>, vector<512x128xbf16>,
    return
  }
  func.func @transform_0(%arg0: i32) -> (i32, i32) {
    %c0_i32 = arith.constant 0 : i32
    %c0_i32_0 = arith.constant 0 : i32
    return %arg0, %c0_i32 : i32, i32
  }
  func.func @transform_1(%arg0: i32) -> (i32, i32) {
    %c0_i32 = arith.constant 0 : i32
    %c0_i32_0 = arith.constant 0 : i32
    %c0_i32_1 = arith.constant 0 : i32
    return %c0_i32, %c0_i32_0 : i32, i32
  }
  func.func @transform_2(%arg0: i32) -> (i32, i32) {
    %c0_i32 = arith.constant 0 : i32
    %c0_i32_0 = arith.constant 0 : i32
    return %arg0, %c0_i32 : i32, i32
  }
}

module attributes {stable_mosaic.version = 11 : i64} {
  func.func @_gemm_stats_kernel(%arg0: i32, %arg1: memref<128x128xbf16, #tpu.memory_space<vmem>>, %arg2: memref<128x128xbf16, #tpu.memory_space<vmem>>, %arg3: memref<128x128xbf16, #tpu.memory_space<vmem>>, %arg4: memref<1x8x128xf32, #tpu.memory_space<vmem>>) attributes {dimension_semantics = [#tpu.dimension_semantics<parallel>], iteration_bounds = array<i64: 1>, scalar_prefetch = 0 : i64, scratch_operands = 0 : i64, tpu.core_type = #tpu.core_type<tc>, window_params = [{transform_indices = @transform_0, window_bounds = array<i64: 128, 128>}, {pipeline_mode = #tpu.pipeline_mode<synchronous>, transform_indices = @transform_1, window_bounds = array<i64: 128, 128>}, {transform_indices = @transform_2, window_bounds = array<i64: 128, 128>}, {transform_indices = @transform_3, window_bounds = array<i64: 1, 8, 128>}]} {
    %c0 = arith.constant 0 : index
    %c0_0 = arith.constant 0 : index
    %0 = vector.load %arg1[%c0, %c0_0] : memref<128x128xbf16, #tpu.memory_space<vmem>>, vector<128x128xbf16>
    %c0_1 = arith.constant 0 : index
    %c0_2 = arith.constant 0 : index
    %1 = vector.load %arg2[%c0_1, %c0_2] : memref<128x128xbf16, #tpu.memory_space<vmem>>, vector<128x128xbf16>
    %cst = arith.constant dense<0.000000e+00> : vector<128x128xf32>
    %2 = tpu.matmul %0, %1, %cst {dimension_numbers = #tpu.dot_dimension_numbers<[1], [0], [0], [1], [0, 0, 1, 1], [], []>} : vector<128x128xbf16>, vector<128x128xbf16>, vector<128x128xf32> -> vector<128x128xf32>
    %3 = arith.truncf %2 : vector<128x128xf32> to vector<128x128xbf16>
    %c0_3 = arith.constant 0 : index
    %c0_4 = arith.constant 0 : index
    %4 = vector.load %arg3[%c0_3, %c0_4] : memref<128x128xbf16, #tpu.memory_space<vmem>>, vector<128x128xbf16>
    tpu.vector_store %arg3[%c0_3, %c0_4], %3 {strides = array<i32>} : memref<128x128xbf16, #tpu.memory_space<vmem>>, vector<128x128xbf16>,
    %cst_5 = arith.constant dense<0.000000e+00> : vector<128xf32>
    %5 = vector.multi_reduction <add>, %2, %cst_5 [0] : vector<128x128xf32> to vector<128xf32>
    %6 = vector.shape_cast %5 : vector<128xf32> to vector<1x128xf32>
    %7 = arith.mulf %2, %2 : vector<128x128xf32>
    %cst_6 = arith.constant dense<0.000000e+00> : vector<128xf32>
    %8 = vector.multi_reduction <add>, %7, %cst_6 [0] : vector<128x128xf32> to vector<128xf32>
    %9 = vector.shape_cast %8 : vector<128xf32> to vector<1x128xf32>
    %cst_7 = arith.constant 0.000000e+00 : f32
    %10 = vector.broadcast %cst_7 : f32 to vector<6x128xf32>
    %11 = tpu.concatenate %6, %9, %10 in 0 : vector<1x128xf32>, vector<1x128xf32>, vector<6x128xf32> -> vector<8x128xf32>
    %12 = vector.shape_cast %11 : vector<8x128xf32> to vector<1x8x128xf32>
    %c0_8 = arith.constant 0 : index
    %c0_9 = arith.constant 0 : index
    %c0_10 = arith.constant 0 : index
    %13 = vector.load %arg4[%c0_8, %c0_9, %c0_10] : memref<1x8x128xf32, #tpu.memory_space<vmem>>, vector<1x8x128xf32>
    tpu.vector_store %arg4[%c0_8, %c0_9, %c0_10], %12 {strides = array<i32>} : memref<1x8x128xf32, #tpu.memory_space<vmem>>, vector<1x8x128xf32>,
    return
  }
  func.func @transform_0(%arg0: i32) -> (i32, i32) {
    %c0_i32 = arith.constant 0 : i32
    %c0_i32_0 = arith.constant 0 : i32
    return %arg0, %c0_i32 : i32, i32
  }
  func.func @transform_1(%arg0: i32) -> (i32, i32) {
    %c0_i32 = arith.constant 0 : i32
    %c0_i32_0 = arith.constant 0 : i32
    %c0_i32_1 = arith.constant 0 : i32
    return %c0_i32, %c0_i32_0 : i32, i32
  }
  func.func @transform_2(%arg0: i32) -> (i32, i32) {
    %c0_i32 = arith.constant 0 : i32
    %c0_i32_0 = arith.constant 0 : i32
    return %arg0, %c0_i32 : i32, i32
  }
  func.func @transform_3(%arg0: i32) -> (i32, i32, i32) {
    %c0_i32 = arith.constant 0 : i32
    %c0_i32_0 = arith.constant 0 : i32
    %c0_i32_1 = arith.constant 0 : i32
    return %arg0, %c0_i32, %c0_i32_0 : i32, i32, i32
  }
}

module attributes {stable_mosaic.version = 11 : i64} {
  func.func @_bn_act_kernel(%arg0: i32, %arg1: memref<128x128xbf16, #tpu.memory_space<vmem>>, %arg2: memref<1x128xf32, #tpu.memory_space<vmem>>, %arg3: memref<1x128xf32, #tpu.memory_space<vmem>>, %arg4: memref<128x128xbf16, #tpu.memory_space<vmem>>) attributes {dimension_semantics = [#tpu.dimension_semantics<parallel>], iteration_bounds = array<i64: 1>, scalar_prefetch = 0 : i64, scratch_operands = 0 : i64, tpu.core_type = #tpu.core_type<tc>, window_params = [{transform_indices = @transform_0, window_bounds = array<i64: 128, 128>}, {pipeline_mode = #tpu.pipeline_mode<synchronous>, transform_indices = @transform_1, window_bounds = array<i64: 1, 128>}, {pipeline_mode = #tpu.pipeline_mode<synchronous>, transform_indices = @transform_2, window_bounds = array<i64: 1, 128>}, {transform_indices = @transform_3, window_bounds = array<i64: 128, 128>}]} {
    %c0 = arith.constant 0 : index
    %c0_0 = arith.constant 0 : index
    %0 = vector.load %arg1[%c0, %c0_0] : memref<128x128xbf16, #tpu.memory_space<vmem>>, vector<128x128xbf16>
    %1 = arith.extf %0 : vector<128x128xbf16> to vector<128x128xf32>
    %c0_1 = arith.constant 0 : index
    %c0_2 = arith.constant 0 : index
    %2 = vector.load %arg2[%c0_1, %c0_2] : memref<1x128xf32, #tpu.memory_space<vmem>>, vector<1x128xf32>
    %3 = vector.broadcast %2 : vector<1x128xf32> to vector<128x128xf32>
    %4 = arith.mulf %1, %3 : vector<128x128xf32>
    %c0_3 = arith.constant 0 : index
    %c0_4 = arith.constant 0 : index
    %5 = vector.load %arg3[%c0_3, %c0_4] : memref<1x128xf32, #tpu.memory_space<vmem>>, vector<1x128xf32>
    %6 = vector.broadcast %5 : vector<1x128xf32> to vector<128x128xf32>
    %7 = arith.addf %4, %6 : vector<128x128xf32>
    %cst = arith.constant 0.000000e+00 : f32
    %8 = vector.broadcast %cst : f32 to vector<128x128xf32>
    %9 = arith.cmpf oge, %7, %8 : vector<128x128xf32>
    %cst_5 = arith.constant 2.000000e-01 : f32
    %10 = vector.broadcast %cst_5 : f32 to vector<128x128xf32>
    %11 = arith.mulf %10, %7 : vector<128x128xf32>
    %12 = arith.select %9, %7, %11 : vector<128x128xi1>, vector<128x128xf32>
    %13 = arith.truncf %12 : vector<128x128xf32> to vector<128x128xbf16>
    %c0_6 = arith.constant 0 : index
    %c0_7 = arith.constant 0 : index
    %14 = vector.load %arg4[%c0_6, %c0_7] : memref<128x128xbf16, #tpu.memory_space<vmem>>, vector<128x128xbf16>
    tpu.vector_store %arg4[%c0_6, %c0_7], %13 {strides = array<i32>} : memref<128x128xbf16, #tpu.memory_space<vmem>>, vector<128x128xbf16>,
    return
  }
  func.func @transform_0(%arg0: i32) -> (i32, i32) {
    %c0_i32 = arith.constant 0 : i32
    %c0_i32_0 = arith.constant 0 : i32
    return %arg0, %c0_i32 : i32, i32
  }
  func.func @transform_1(%arg0: i32) -> (i32, i32) {
    %c0_i32 = arith.constant 0 : i32
    %c0_i32_0 = arith.constant 0 : i32
    %c0_i32_1 = arith.constant 0 : i32
    return %c0_i32, %c0_i32_0 : i32, i32
  }
  func.func @transform_2(%arg0: i32) -> (i32, i32) {
    %c0_i32 = arith.constant 0 : i32
    %c0_i32_0 = arith.constant 0 : i32
    %c0_i32_1 = arith.constant 0 : i32
    return %c0_i32, %c0_i32_0 : i32, i32
  }
  func.func @transform_3(%arg0: i32) -> (i32, i32) {
    %c0_i32 = arith.constant 0 : i32
    %c0_i32_0 = arith.constant 0 : i32
    return %arg0, %c0_i32 : i32, i32
  }
}

module attributes {stable_mosaic.version = 11 : i64} {
  func.func @_bn_act_kernel(%arg0: i32, %arg1: memref<32x128xbf16, #tpu.memory_space<vmem>>, %arg2: memref<1x128xf32, #tpu.memory_space<vmem>>, %arg3: memref<1x128xf32, #tpu.memory_space<vmem>>, %arg4: memref<32x128xbf16, #tpu.memory_space<vmem>>) attributes {dimension_semantics = [#tpu.dimension_semantics<parallel>], iteration_bounds = array<i64: 1>, scalar_prefetch = 0 : i64, scratch_operands = 0 : i64, tpu.core_type = #tpu.core_type<tc>, window_params = [{transform_indices = @transform_0, window_bounds = array<i64: 32, 128>}, {pipeline_mode = #tpu.pipeline_mode<synchronous>, transform_indices = @transform_1, window_bounds = array<i64: 1, 128>}, {pipeline_mode = #tpu.pipeline_mode<synchronous>, transform_indices = @transform_2, window_bounds = array<i64: 1, 128>}, {transform_indices = @transform_3, window_bounds = array<i64: 32, 128>}]} {
    %c0 = arith.constant 0 : index
    %c0_0 = arith.constant 0 : index
    %0 = vector.load %arg1[%c0, %c0_0] : memref<32x128xbf16, #tpu.memory_space<vmem>>, vector<32x128xbf16>
    %1 = arith.extf %0 : vector<32x128xbf16> to vector<32x128xf32>
    %c0_1 = arith.constant 0 : index
    %c0_2 = arith.constant 0 : index
    %2 = vector.load %arg2[%c0_1, %c0_2] : memref<1x128xf32, #tpu.memory_space<vmem>>, vector<1x128xf32>
    %3 = vector.broadcast %2 : vector<1x128xf32> to vector<32x128xf32>
    %4 = arith.mulf %1, %3 : vector<32x128xf32>
    %c0_3 = arith.constant 0 : index
    %c0_4 = arith.constant 0 : index
    %5 = vector.load %arg3[%c0_3, %c0_4] : memref<1x128xf32, #tpu.memory_space<vmem>>, vector<1x128xf32>
    %6 = vector.broadcast %5 : vector<1x128xf32> to vector<32x128xf32>
    %7 = arith.addf %4, %6 : vector<32x128xf32>
    %cst = arith.constant 0.000000e+00 : f32
    %8 = vector.broadcast %cst : f32 to vector<32x128xf32>
    %9 = arith.cmpf oge, %7, %8 : vector<32x128xf32>
    %cst_5 = arith.constant 2.000000e-01 : f32
    %10 = vector.broadcast %cst_5 : f32 to vector<32x128xf32>
    %11 = arith.mulf %10, %7 : vector<32x128xf32>
    %12 = arith.select %9, %7, %11 : vector<32x128xi1>, vector<32x128xf32>
    %13 = arith.truncf %12 : vector<32x128xf32> to vector<32x128xbf16>
    %c0_6 = arith.constant 0 : index
    %c0_7 = arith.constant 0 : index
    %14 = vector.load %arg4[%c0_6, %c0_7] : memref<32x128xbf16, #tpu.memory_space<vmem>>, vector<32x128xbf16>
    tpu.vector_store %arg4[%c0_6, %c0_7], %13 {strides = array<i32>} : memref<32x128xbf16, #tpu.memory_space<vmem>>, vector<32x128xbf16>,
    return
  }
  func.func @transform_0(%arg0: i32) -> (i32, i32) {
    %c0_i32 = arith.constant 0 : i32
    %c0_i32_0 = arith.constant 0 : i32
    return %arg0, %c0_i32 : i32, i32
  }
  func.func @transform_1(%arg0: i32) -> (i32, i32) {
    %c0_i32 = arith.constant 0 : i32
    %c0_i32_0 = arith.constant 0 : i32
    %c0_i32_1 = arith.constant 0 : i32
    return %c0_i32, %c0_i32_0 : i32, i32
  }
  func.func @transform_2(%arg0: i32) -> (i32, i32) {
    %c0_i32 = arith.constant 0 : i32
    %c0_i32_0 = arith.constant 0 : i32
    %c0_i32_1 = arith.constant 0 : i32
    return %c0_i32, %c0_i32_0 : i32, i32
  }
  func.func @transform_3(%arg0: i32) -> (i32, i32) {
    %c0_i32 = arith.constant 0 : i32
    %c0_i32_0 = arith.constant 0 : i32
    return %arg0, %c0_i32 : i32, i32
  }
}

module attributes {stable_mosaic.version = 11 : i64} {
  func.func @_gemm_stats_kernel(%arg0: i32, %arg1: memref<32x256xbf16, #tpu.memory_space<vmem>>, %arg2: memref<256x128xbf16, #tpu.memory_space<vmem>>, %arg3: memref<32x128xbf16, #tpu.memory_space<vmem>>, %arg4: memref<1x8x128xf32, #tpu.memory_space<vmem>>) attributes {dimension_semantics = [#tpu.dimension_semantics<parallel>], iteration_bounds = array<i64: 1>, scalar_prefetch = 0 : i64, scratch_operands = 0 : i64, tpu.core_type = #tpu.core_type<tc>, window_params = [{transform_indices = @transform_0, window_bounds = array<i64: 32, 256>}, {pipeline_mode = #tpu.pipeline_mode<synchronous>, transform_indices = @transform_1, window_bounds = array<i64: 256, 128>}, {transform_indices = @transform_2, window_bounds = array<i64: 32, 128>}, {transform_indices = @transform_3, window_bounds = array<i64: 1, 8, 128>}]} {
    %c0 = arith.constant 0 : index
    %c0_0 = arith.constant 0 : index
    %0 = vector.load %arg1[%c0, %c0_0] : memref<32x256xbf16, #tpu.memory_space<vmem>>, vector<32x256xbf16>
    %c0_1 = arith.constant 0 : index
    %c0_2 = arith.constant 0 : index
    %1 = vector.load %arg2[%c0_1, %c0_2] : memref<256x128xbf16, #tpu.memory_space<vmem>>, vector<256x128xbf16>
    %cst = arith.constant dense<0.000000e+00> : vector<32x128xf32>
    %2 = tpu.matmul %0, %1, %cst {dimension_numbers = #tpu.dot_dimension_numbers<[1], [0], [0], [1], [0, 0, 1, 1], [], []>} : vector<32x256xbf16>, vector<256x128xbf16>, vector<32x128xf32> -> vector<32x128xf32>
    %3 = arith.truncf %2 : vector<32x128xf32> to vector<32x128xbf16>
    %c0_3 = arith.constant 0 : index
    %c0_4 = arith.constant 0 : index
    %4 = vector.load %arg3[%c0_3, %c0_4] : memref<32x128xbf16, #tpu.memory_space<vmem>>, vector<32x128xbf16>
    tpu.vector_store %arg3[%c0_3, %c0_4], %3 {strides = array<i32>} : memref<32x128xbf16, #tpu.memory_space<vmem>>, vector<32x128xbf16>,
    %cst_5 = arith.constant dense<0.000000e+00> : vector<128xf32>
    %5 = vector.multi_reduction <add>, %2, %cst_5 [0] : vector<32x128xf32> to vector<128xf32>
    %6 = vector.shape_cast %5 : vector<128xf32> to vector<1x128xf32>
    %7 = arith.mulf %2, %2 : vector<32x128xf32>
    %cst_6 = arith.constant dense<0.000000e+00> : vector<128xf32>
    %8 = vector.multi_reduction <add>, %7, %cst_6 [0] : vector<32x128xf32> to vector<128xf32>
    %9 = vector.shape_cast %8 : vector<128xf32> to vector<1x128xf32>
    %cst_7 = arith.constant 0.000000e+00 : f32
    %10 = vector.broadcast %cst_7 : f32 to vector<6x128xf32>
    %11 = tpu.concatenate %6, %9, %10 in 0 : vector<1x128xf32>, vector<1x128xf32>, vector<6x128xf32> -> vector<8x128xf32>
    %12 = vector.shape_cast %11 : vector<8x128xf32> to vector<1x8x128xf32>
    %c0_8 = arith.constant 0 : index
    %c0_9 = arith.constant 0 : index
    %c0_10 = arith.constant 0 : index
    %13 = vector.load %arg4[%c0_8, %c0_9, %c0_10] : memref<1x8x128xf32, #tpu.memory_space<vmem>>, vector<1x8x128xf32>
    tpu.vector_store %arg4[%c0_8, %c0_9, %c0_10], %12 {strides = array<i32>} : memref<1x8x128xf32, #tpu.memory_space<vmem>>, vector<1x8x128xf32>,
    return
  }
  func.func @transform_0(%arg0: i32) -> (i32, i32) {
    %c0_i32 = arith.constant 0 : i32
    %c0_i32_0 = arith.constant 0 : i32
    return %arg0, %c0_i32 : i32, i32
  }
  func.func @transform_1(%arg0: i32) -> (i32, i32) {
    %c0_i32 = arith.constant 0 : i32
    %c0_i32_0 = arith.constant 0 : i32
    %c0_i32_1 = arith.constant 0 : i32
    return %c0_i32, %c0_i32_0 : i32, i32
  }
  func.func @transform_2(%arg0: i32) -> (i32, i32) {
    %c0_i32 = arith.constant 0 : i32
    %c0_i32_0 = arith.constant 0 : i32
    return %arg0, %c0_i32 : i32, i32
  }
  func.func @transform_3(%arg0: i32) -> (i32, i32, i32) {
    %c0_i32 = arith.constant 0 : i32
    %c0_i32_0 = arith.constant 0 : i32
    %c0_i32_1 = arith.constant 0 : i32
    return %arg0, %c0_i32, %c0_i32_0 : i32, i32, i32
  }
}

module attributes {stable_mosaic.version = 11 : i64} {
  func.func @_bn_act_kernel(%arg0: i32, %arg1: memref<16x128xbf16, #tpu.memory_space<vmem>>, %arg2: memref<1x128xf32, #tpu.memory_space<vmem>>, %arg3: memref<1x128xf32, #tpu.memory_space<vmem>>, %arg4: memref<16x128xbf16, #tpu.memory_space<vmem>>) attributes {dimension_semantics = [#tpu.dimension_semantics<parallel>], iteration_bounds = array<i64: 1>, scalar_prefetch = 0 : i64, scratch_operands = 0 : i64, tpu.core_type = #tpu.core_type<tc>, window_params = [{transform_indices = @transform_0, window_bounds = array<i64: 16, 128>}, {pipeline_mode = #tpu.pipeline_mode<synchronous>, transform_indices = @transform_1, window_bounds = array<i64: 1, 128>}, {pipeline_mode = #tpu.pipeline_mode<synchronous>, transform_indices = @transform_2, window_bounds = array<i64: 1, 128>}, {transform_indices = @transform_3, window_bounds = array<i64: 16, 128>}]} {
    %c0 = arith.constant 0 : index
    %c0_0 = arith.constant 0 : index
    %0 = vector.load %arg1[%c0, %c0_0] : memref<16x128xbf16, #tpu.memory_space<vmem>>, vector<16x128xbf16>
    %1 = arith.extf %0 : vector<16x128xbf16> to vector<16x128xf32>
    %c0_1 = arith.constant 0 : index
    %c0_2 = arith.constant 0 : index
    %2 = vector.load %arg2[%c0_1, %c0_2] : memref<1x128xf32, #tpu.memory_space<vmem>>, vector<1x128xf32>
    %3 = vector.broadcast %2 : vector<1x128xf32> to vector<16x128xf32>
    %4 = arith.mulf %1, %3 : vector<16x128xf32>
    %c0_3 = arith.constant 0 : index
    %c0_4 = arith.constant 0 : index
    %5 = vector.load %arg3[%c0_3, %c0_4] : memref<1x128xf32, #tpu.memory_space<vmem>>, vector<1x128xf32>
    %6 = vector.broadcast %5 : vector<1x128xf32> to vector<16x128xf32>
    %7 = arith.addf %4, %6 : vector<16x128xf32>
    %cst = arith.constant 0.000000e+00 : f32
    %8 = vector.broadcast %cst : f32 to vector<16x128xf32>
    %9 = arith.cmpf oge, %7, %8 : vector<16x128xf32>
    %cst_5 = arith.constant 2.000000e-01 : f32
    %10 = vector.broadcast %cst_5 : f32 to vector<16x128xf32>
    %11 = arith.mulf %10, %7 : vector<16x128xf32>
    %12 = arith.select %9, %7, %11 : vector<16x128xi1>, vector<16x128xf32>
    %13 = arith.truncf %12 : vector<16x128xf32> to vector<16x128xbf16>
    %c0_6 = arith.constant 0 : index
    %c0_7 = arith.constant 0 : index
    %14 = vector.load %arg4[%c0_6, %c0_7] : memref<16x128xbf16, #tpu.memory_space<vmem>>, vector<16x128xbf16>
    tpu.vector_store %arg4[%c0_6, %c0_7], %13 {strides = array<i32>} : memref<16x128xbf16, #tpu.memory_space<vmem>>, vector<16x128xbf16>,
    return
  }
  func.func @transform_0(%arg0: i32) -> (i32, i32) {
    %c0_i32 = arith.constant 0 : i32
    %c0_i32_0 = arith.constant 0 : i32
    return %arg0, %c0_i32 : i32, i32
  }
  func.func @transform_1(%arg0: i32) -> (i32, i32) {
    %c0_i32 = arith.constant 0 : i32
    %c0_i32_0 = arith.constant 0 : i32
    %c0_i32_1 = arith.constant 0 : i32
    return %c0_i32, %c0_i32_0 : i32, i32
  }
  func.func @transform_2(%arg0: i32) -> (i32, i32) {
    %c0_i32 = arith.constant 0 : i32
    %c0_i32_0 = arith.constant 0 : i32
    %c0_i32_1 = arith.constant 0 : i32
    return %c0_i32, %c0_i32_0 : i32, i32
  }
  func.func @transform_3(%arg0: i32) -> (i32, i32) {
    %c0_i32 = arith.constant 0 : i32
    %c0_i32_0 = arith.constant 0 : i32
    return %arg0, %c0_i32 : i32, i32
  }
}

module attributes {stable_mosaic.version = 11 : i64} {
  func.func @_gemm_stats_kernel(%arg0: i32, %arg1: memref<16x512xbf16, #tpu.memory_space<vmem>>, %arg2: memref<512x128xbf16, #tpu.memory_space<vmem>>, %arg3: memref<16x128xbf16, #tpu.memory_space<vmem>>, %arg4: memref<1x8x128xf32, #tpu.memory_space<vmem>>) attributes {dimension_semantics = [#tpu.dimension_semantics<parallel>], iteration_bounds = array<i64: 1>, scalar_prefetch = 0 : i64, scratch_operands = 0 : i64, tpu.core_type = #tpu.core_type<tc>, window_params = [{transform_indices = @transform_0, window_bounds = array<i64: 16, 512>}, {pipeline_mode = #tpu.pipeline_mode<synchronous>, transform_indices = @transform_1, window_bounds = array<i64: 512, 128>}, {transform_indices = @transform_2, window_bounds = array<i64: 16, 128>}, {transform_indices = @transform_3, window_bounds = array<i64: 1, 8, 128>}]} {
    %c0 = arith.constant 0 : index
    %c0_0 = arith.constant 0 : index
    %0 = vector.load %arg1[%c0, %c0_0] : memref<16x512xbf16, #tpu.memory_space<vmem>>, vector<16x512xbf16>
    %c0_1 = arith.constant 0 : index
    %c0_2 = arith.constant 0 : index
    %1 = vector.load %arg2[%c0_1, %c0_2] : memref<512x128xbf16, #tpu.memory_space<vmem>>, vector<512x128xbf16>
    %cst = arith.constant dense<0.000000e+00> : vector<16x128xf32>
    %2 = tpu.matmul %0, %1, %cst {dimension_numbers = #tpu.dot_dimension_numbers<[1], [0], [0], [1], [0, 0, 1, 1], [], []>} : vector<16x512xbf16>, vector<512x128xbf16>, vector<16x128xf32> -> vector<16x128xf32>
    %3 = arith.truncf %2 : vector<16x128xf32> to vector<16x128xbf16>
    %c0_3 = arith.constant 0 : index
    %c0_4 = arith.constant 0 : index
    %4 = vector.load %arg3[%c0_3, %c0_4] : memref<16x128xbf16, #tpu.memory_space<vmem>>, vector<16x128xbf16>
    tpu.vector_store %arg3[%c0_3, %c0_4], %3 {strides = array<i32>} : memref<16x128xbf16, #tpu.memory_space<vmem>>, vector<16x128xbf16>,
    %cst_5 = arith.constant dense<0.000000e+00> : vector<128xf32>
    %5 = vector.multi_reduction <add>, %2, %cst_5 [0] : vector<16x128xf32> to vector<128xf32>
    %6 = vector.shape_cast %5 : vector<128xf32> to vector<1x128xf32>
    %7 = arith.mulf %2, %2 : vector<16x128xf32>
    %cst_6 = arith.constant dense<0.000000e+00> : vector<128xf32>
    %8 = vector.multi_reduction <add>, %7, %cst_6 [0] : vector<16x128xf32> to vector<128xf32>
    %9 = vector.shape_cast %8 : vector<128xf32> to vector<1x128xf32>
    %cst_7 = arith.constant 0.000000e+00 : f32
    %10 = vector.broadcast %cst_7 : f32 to vector<6x128xf32>
    %11 = tpu.concatenate %6, %9, %10 in 0 : vector<1x128xf32>, vector<1x128xf32>, vector<6x128xf32> -> vector<8x128xf32>
    %12 = vector.shape_cast %11 : vector<8x128xf32> to vector<1x8x128xf32>
    %c0_8 = arith.constant 0 : index
    %c0_9 = arith.constant 0 : index
    %c0_10 = arith.constant 0 : index
    %13 = vector.load %arg4[%c0_8, %c0_9, %c0_10] : memref<1x8x128xf32, #tpu.memory_space<vmem>>, vector<1x8x128xf32>
    tpu.vector_store %arg4[%c0_8, %c0_9, %c0_10], %12 {strides = array<i32>} : memref<1x8x128xf32, #tpu.memory_space<vmem>>, vector<1x8x128xf32>,
    return
  }
  func.func @transform_0(%arg0: i32) -> (i32, i32) {
    %c0_i32 = arith.constant 0 : i32
    %c0_i32_0 = arith.constant 0 : i32
    return %arg0, %c0_i32 : i32, i32
  }
  func.func @transform_1(%arg0: i32) -> (i32, i32) {
    %c0_i32 = arith.constant 0 : i32
    %c0_i32_0 = arith.constant 0 : i32
    %c0_i32_1 = arith.constant 0 : i32
    return %c0_i32, %c0_i32_0 : i32, i32
  }
  func.func @transform_2(%arg0: i32) -> (i32, i32) {
    %c0_i32 = arith.constant 0 : i32
    %c0_i32_0 = arith.constant 0 : i32
    return %arg0, %c0_i32 : i32, i32
  }
  func.func @transform_3(%arg0: i32) -> (i32, i32, i32) {
    %c0_i32 = arith.constant 0 : i32
    %c0_i32_0 = arith.constant 0 : i32
    %c0_i32_1 = arith.constant 0 : i32
    return %arg0, %c0_i32, %c0_i32_0 : i32, i32, i32
  }
}

</mosaic_0001>

<llo_original>
// kernel: netd_forward.7
$region0: #{netd_forward.7}
  #allocation0 [shape = 'u32[]', space=smem, size = 0x4, offset = 0x4, fixed_abs, tag = 'smem constant byte address 0x4 - core index']
  #allocation1 [shape = 'u32[144,128]{1,0:T(1,128)}', space=vmem, size = 0x12000, scoped, tag = 'internal scratch']
  %s0 = inlined_call_operand.vmem [shape: bf16[512,128], index: 0, kind: input, shape index: {}]
  %s1 = inlined_call_operand.vmem [shape: bf16[128,128], index: 1, kind: input, shape index: {}]
  %s2 = inlined_call_operand.vmem [shape: bf16[512,128], index: 2, kind: output, shape index: {}]
  %s3 = sld [smem:[#allocation0]]
  $region18: #{netd_forward.7} parent=0
    _
  %s5 = ssub.s32 1, %s3
  %s6 = scalar_select 0, %s5, %s3
  // Predicated region
  $region2: #{netd_forward.7} parent=0 // pred_check
    _
  $region3: #{netd_forward.7} parent=0 // pred_check_branch
    %8 = sbr.rel (0) target = $region5
  $region4: #{netd_forward.7} parent=0 // pred_region
    _
  $region5: #{netd_forward.7} parent=0 // pred_fallthru
    _
  // Predicated region
  $region6: #{netd_forward.7} parent=0 // pred_check
    _
  $region7: #{netd_forward.7} parent=0 // pred_check_branch
    %10 = sbr.rel (0) target = $region9
  $region8: #{netd_forward.7} parent=0 // pred_region
    _
  $region9: #{netd_forward.7} parent=0 // pred_fallthru
    _
  %v12 = vld [vmem:[%s0] sm:$0xf]
  %v13 = vld [vmem:[%s0 + $0x4] sm:$0xf]
  %v14 = vld [vmem:[%s0 + $0x8] sm:$0xf]
  %v15 = vld [vmem:[%s0 + $0xc] sm:$0xf]
  %v16 = vld [vmem:[%s0 + $0x10] sm:$0xf]
  %v17 = vld [vmem:[%s0 + $0x14] sm:$0xf]
  %v18 = vld [vmem:[%s0 + $0x18] sm:$0xf]
  %v19 = vld [vmem:[%s0 + $0x1c] sm:$0xf]
  %v20 = vld [vmem:[%s0 + $0x20] sm:$0xf]
  %v21 = vld [vmem:[%s0 + $0x24] sm:$0xf]
  %v22 = vld [vmem:[%s0 + $0x28] sm:$0xf]
  %v23 = vld [vmem:[%s0 + $0x2c] sm:$0xf]
  %v24 = vld [vmem:[%s0 + $0x30] sm:$0xf]
  %v25 = vld [vmem:[%s0 + $0x34] sm:$0xf]
  %v26 = vld [vmem:[%s0 + $0x38] sm:$0xf]
  %v27 = vld [vmem:[%s0 + $0x3c] sm:$0xf]
  %v28 = vld [vmem:[%s0 + $0x40] sm:$0xf]
  %v29 = vld [vmem:[%s0 + $0x44] sm:$0xf]
  %v30 = vld [vmem:[%s0 + $0x48] sm:$0xf]
  %v31 = vld [vmem:[%s0 + $0x4c] sm:$0xf]
  %v32 = vld [vmem:[%s0 + $0x50] sm:$0xf]
  %v33 = vld [vmem:[%s0 + $0x54] sm:$0xf]
  %v34 = vld [vmem:[%s0 + $0x58] sm:$0xf]
  %v35 = vld [vmem:[%s0 + $0x5c] sm:$0xf]
  %v36 = vld [vmem:[%s0 + $0x60] sm:$0xf]
  %v37 = vld [vmem:[%s0 + $0x64] sm:$0xf]
  %v38 = vld [vmem:[%s0 + $0x68] sm:$0xf]
  %v39 = vld [vmem:[%s0 + $0x6c] sm:$0xf]
  %v40 = vld [vmem:[%s0 + $0x70] sm:$0xf]
  %v41 = vld [vmem:[%s0 + $0x74] sm:$0xf]
  %v42 = vld [vmem:[%s0 + $0x78] sm:$0xf]
  %v43 = vld [vmem:[%s0 + $0x7c] sm:$0xf]
  %v44 = vld [vmem:[%s0 + $0x80] sm:$0xf]
  %v45 = vld [vmem:[%s0 + $0x84] sm:$0xf]
  %v46 = vld [vmem:[%s0 + $0x88] sm:$0xf]
  %v47 = vld [vmem:[%s0 + $0x8c] sm:$0xf]
  %v48 = vld [vmem:[%s0 + $0x90] sm:$0xf]
  %v49 = vld [vmem:[%s0 + $0x94] sm:$0xf]
  %v50 = vld [vmem:[%s0 + $0x98] sm:$0xf]
  %v51 = vld [vmem:[%s0 + $0x9c] sm:$0xf]
  %v52 = vld [vmem:[%s0 + $0xa0] sm:$0xf]
  %v53 = vld [vmem:[%s0 + $0xa4] sm:$0xf]
  %v54 = vld [vmem:[%s0 + $0xa8] sm:$0xf]
  %v55 = vld [vmem:[%s0 + $0xac] sm:$0xf]
  %v56 = vld [vmem:[%s0 + $0xb0] sm:$0xf]
  %v57 = vld [vmem:[%s0 + $0xb4] sm:$0xf]
  %v58 = vld [vmem:[%s0 + $0xb8] sm:$0xf]
  %v59 = vld [vmem:[%s0 + $0xbc] sm:$0xf]
  %v60 = vld [vmem:[%s0 + $0xc0] sm:$0xf]
  %v61 = vld [vmem:[%s0 + $0xc4] sm:$0xf]
  %v62 = vld [vmem:[%s0 + $0xc8] sm:$0xf]
  %v63 = vld [vmem:[%s0 + $0xcc] sm:$0xf]
  %v64 = vld [vmem:[%s0 + $0xd0] sm:$0xf]
  %v65 = vld [vmem:[%s0 + $0xd4] sm:$0xf]
  %v66 = vld [vmem:[%s0 + $0xd8] sm:$0xf]
  %v67 = vld [vmem:[%s0 + $0xdc] sm:$0xf]
  %v68 = vld [vmem:[%s0 + $0xe0] sm:$0xf]
  %v69 = vld [vmem:[%s0 + $0xe4] sm:$0xf]
  %v70 = vld [vmem:[%s0 + $0xe8] sm:$0xf]
  %v71 = vld [vmem:[%s0 + $0xec] sm:$0xf]
  %v72 = vld [vmem:[%s0 + $0xf0] sm:$0xf]
  %v73 = vld [vmem:[%s0 + $0xf4] sm:$0xf]
  %v74 = vld [vmem:[%s0 + $0xf8] sm:$0xf]
  %v75 = vld [vmem:[%s0 + $0xfc] sm:$0xf]
  %v76 = vld [vmem:[%s1] sm:$0xf]
  %v77 = vld [vmem:[%s1 + $0x4] sm:$0xf]
  %v78 = vld [vmem:[%s1 + $0x8] sm:$0xf]
  %v79 = vld [vmem:[%s1 + $0xc] sm:$0xf]
  %v80 = vld [vmem:[%s1 + $0x10] sm:$0xf]
  %v81 = vld [vmem:[%s1 + $0x14] sm:$0xf]
  %v82 = vld [vmem:[%s1 + $0x18] sm:$0xf]
  %v83 = vld [vmem:[%s1 + $0x1c] sm:$0xf]
  %v84 = vld [vmem:[%s1 + $0x20] sm:$0xf]
  %v85 = vld [vmem:[%s1 + $0x24] sm:$0xf]
  %v86 = vld [vmem:[%s1 + $0x28] sm:$0xf]
  %v87 = vld [vmem:[%s1 + $0x2c] sm:$0xf]
  %v88 = vld [vmem:[%s1 + $0x30] sm:$0xf]
  %v89 = vld [vmem:[%s1 + $0x34] sm:$0xf]
  %v90 = vld [vmem:[%s1 + $0x38] sm:$0xf]
  %v91 = vld [vmem:[%s1 + $0x3c] sm:$0xf]
  %v156 = vunpack.c.l.b16 %v12
  %v157 = vunpack.c.l.b16 %v13
  %v158 = vunpack.c.l.b16 %v14
  %v159 = vunpack.c.l.b16 %v15
  %v160 = vunpack.c.l.b16 %v16
  %v161 = vunpack.c.l.b16 %v17
  %v162 = vunpack.c.l.b16 %v18
  %v163 = vunpack.c.l.b16 %v19
  %v164 = vunpack.c.l.b16 %v20
  %v165 = vunpack.c.l.b16 %v21
  %v166 = vunpack.c.l.b16 %v22
  %v167 = vunpack.c.l.b16 %v23
  %v168 = vunpack.c.l.b16 %v24
  %v169 = vunpack.c.l.b16 %v25
  %v170 = vunpack.c.l.b16 %v26
  %v171 = vunpack.c.l.b16 %v27
  %v172 = vunpack.c.l.b16 %v28
  %v173 = vunpack.c.l.b16 %v29
  %v174 = vunpack.c.l.b16 %v30
  %v175 = vunpack.c.l.b16 %v31
  %v176 = vunpack.c.l.b16 %v32
  %v177 = vunpack.c.l.b16 %v33
  %v178 = vunpack.c.l.b16 %v34
  %v179 = vunpack.c.l.b16 %v35
  %v180 = vunpack.c.l.b16 %v36
  %v181 = vunpack.c.l.b16 %v37
  %v182 = vunpack.c.l.b16 %v38
  %v183 = vunpack.c.l.b16 %v39
  %v184 = vunpack.c.l.b16 %v40
  %v185 = vunpack.c.l.b16 %v41
  %v186 = vunpack.c.l.b16 %v42
  %v187 = vunpack.c.l.b16 %v43
  %v188 = vunpack.c.l.b16 %v44
  %v189 = vunpack.c.l.b16 %v45
  %v190 = vunpack.c.l.b16 %v46
  %v191 = vunpack.c.l.b16 %v47
  %v192 = vunpack.c.l.b16 %v48
  %v193 = vunpack.c.l.b16 %v49
  %v194 = vunpack.c.l.b16 %v50
  %v195 = vunpack.c.l.b16 %v51
  %v196 = vunpack.c.l.b16 %v52
  %v197 = vunpack.c.l.b16 %v53
  %v198 = vunpack.c.l.b16 %v54
  %v199 = vunpack.c.l.b16 %v55
  %v200 = vunpack.c.l.b16 %v56
  %v201 = vunpack.c.l.b16 %v57
  %v202 = vunpack.c.l.b16 %v58
  %v203 = vunpack.c.l.b16 %v59
  %v204 = vunpack.c.l.b16 %v60
  %v205 = vunpack.c.l.b16 %v61
  %v206 = vunpack.c.l.b16 %v62
  %v207 = vunpack.c.l.b16 %v63
  %v208 = vunpack.c.l.b16 %v64
  %v209 = vunpack.c.l.b16 %v65
  %v210 = vunpack.c.l.b16 %v66
  %v211 = vunpack.c.l.b16 %v67
  %v212 = vunpack.c.l.b16 %v68
  %v213 = vunpack.c.l.b16 %v69
  %v214 = vunpack.c.l.b16 %v70
  %v215 = vunpack.c.l.b16 %v71
  %v216 = vunpack.c.l.b16 %v72
  %v217 = vunpack.c.l.b16 %v73
  %v218 = vunpack.c.l.b16 %v74
  %v219 = vunpack.c.l.b16 %v75
  %v220 = vpack.c.b16 %v157, %v156
  %v221 = vpack.c.b16 %v159, %v158
  %v222 = vpack.c.b16 %v161, %v160
  %v223 = vpack.c.b16 %v163, %v162
  %v224 = vpack.c.b16 %v165, %v164
  %v225 = vpack.c.b16 %v167, %v166
  %v226 = vpack.c.b16 %v169, %v168
  %v227 = vpack.c.b16 %v171, %v170
  %v228 = vpack.c.b16 %v173, %v172
  %v229 = vpack.c.b16 %v175, %v174
  %v230 = vpack.c.b16 %v177, %v176
  %v231 = vpack.c.b16 %v179, %v178
  %v232 = vpack.c.b16 %v181, %v180
  %v233 = vpack.c.b16 %v183, %v182
  %v234 = vpack.c.b16 %v185, %v184
  %v235 = vpack.c.b16 %v187, %v186
  %v236 = vpack.c.b16 %v189, %v188
  %v237 = vpack.c.b16 %v191, %v190
  %v238 = vpack.c.b16 %v193, %v192
  %v239 = vpack.c.b16 %v195, %v194
  %v240 = vpack.c.b16 %v197, %v196
  %v241 = vpack.c.b16 %v199, %v198
  %v242 = vpack.c.b16 %v201, %v200
  %v243 = vpack.c.b16 %v203, %v202
  %v244 = vpack.c.b16 %v205, %v204
  %v245 = vpack.c.b16 %v207, %v206
  %v246 = vpack.c.b16 %v209, %v208
  %v247 = vpack.c.b16 %v211, %v210
  %v248 = vpack.c.b16 %v213, %v212
  %v249 = vpack.c.b16 %v215, %v214
  %v250 = vpack.c.b16 %v217, %v216
  %v251 = vpack.c.b16 %v219, %v218
  %v300 = vunpack.c.l.b16 %v76
  %v301 = vunpack.c.l.b16 %v77
  %v302 = vunpack.c.l.b16 %v78
  %v303 = vunpack.c.l.b16 %v79
  %v304 = vunpack.c.l.b16 %v80
  %v305 = vunpack.c.l.b16 %v81
  %v306 = vunpack.c.l.b16 %v82
  %v307 = vunpack.c.l.b16 %v83
  %v308 = vunpack.c.l.b16 %v84
  %v309 = vunpack.c.l.b16 %v85
  %v310 = vunpack.c.l.b16 %v86
  %v311 = vunpack.c.l.b16 %v87
  %v312 = vunpack.c.l.b16 %v88
  %v313 = vunpack.c.l.b16 %v89
  %v314 = vunpack.c.l.b16 %v90
  %v315 = vunpack.c.l.b16 %v91
  %v316 = vpack.c.b16 %v301, %v300
  %v317 = vpack.c.b16 %v303, %v302
  %v318 = vpack.c.b16 %v305, %v304
  %v319 = vpack.c.b16 %v307, %v306
  %v320 = vpack.c.b16 %v309, %v308
  %v321 = vpack.c.b16 %v311, %v310
  %v322 = vpack.c.b16 %v313, %v312
  %v323 = vpack.c.b16 %v315, %v314
  %332 = vmatprep.subr.bf16.mxu0 0
  %333 = vmatpush1.bf16.msra.mxu0 %v316
  %334 = vmatprep.subr.bf16.mxu0 0
  %335 = vmatpush1.bf16.msra.mxu0 %v317
  %336 = vmatprep.subr.bf16.mxu0 0
  %337 = vmatpush1.bf16.msra.mxu0 %v318
  %338 = vmatprep.subr.bf16.mxu0 0
  %339 = vmatpush1.bf16.msra.mxu0 %v319
  %340 = vmatprep.subr.bf16.mxu0 0
  %341 = vmatpush1.bf16.msra.mxu0 %v320
  %342 = vmatprep.subr.bf16.mxu0 0
  %343 = vmatpush1.bf16.msra.mxu0 %v321
  %344 = vmatprep.subr.bf16.mxu0 0
  %345 = vmatpush1.bf16.msra.mxu0 %v322
  %346 = vmatprep.subr.bf16.mxu0 0
  %347 = vmatpush1.bf16.msra.mxu0 %v323
  %348 = vmatprep.subr.bf16.mxu0 0
  %349 = vmatpush1.bf16.msra.mxu0 0
  %350 = vmatprep.subr.bf16.mxu0 0
  %351 = vmatpush1.bf16.msra.mxu0 0
  %352 = vmatprep.subr.bf16.mxu0 0
  %353 = vmatpush1.bf16.msra.mxu0 0
  %354 = vmatprep.subr.bf16.mxu0 0
  %355 = vmatpush1.bf16.msra.mxu0 0
  %356 = vmatprep.subr.bf16.mxu0 0
  %357 = vmatpush1.bf16.msra.mxu0 0
  %358 = vmatprep.subr.bf16.mxu0 0
  %359 = vmatpush1.bf16.msra.mxu0 0
  %360 = vmatprep.subr.bf16.mxu0 0
  %361 = vmatpush1.bf16.msra.mxu0 0
  %362 = vmatprep.subr.bf16.mxu0 0
  %363 = vmatpush1.bf16.msra.mxu0 0
  %364 = vmatprep.mubr.bf16.mxu0 0
  %365 = vmatmul.mubr.bf16.gmra.mrb[0].mxu0 %v220
  %v366 = vpop.f32.mrb[0].mxu0
  %v367 = vadd.f32 0.0, %v366
  %v368 = vpop.f32.mrb[0].mxu0
  %v369 = vpop.f32.mrb[0].mxu0
  %v370 = vadd.f32 0.0, %v369
  %v371 = vpop.f32.mrb[0].mxu0
  %372 = vmatprep.mubr.bf16.mxu0 0
  %373 = vmatmul.mubr.bf16.gmra.mrb[0].mxu0 %v221
  %v374 = vpop.f32.mrb[0].mxu0
  %v375 = vadd.f32 0.0, %v374
  %v376 = vpop.f32.mrb[0].mxu0
  %v377 = vpop.f32.mrb[0].mxu0
  %v378 = vadd.f32 0.0, %v377
  %v379 = vpop.f32.mrb[0].mxu0
  %380 = vmatprep.mubr.bf16.mxu0 0
  %381 = vmatmul.mubr.bf16.gmra.mrb[0].mxu0 %v222
  %v382 = vpop.f32.mrb[0].mxu0
  %v383 = vadd.f32 0.0, %v382
  %v384 = vpop.f32.mrb[0].mxu0
  %v385 = vpop.f32.mrb[0].mxu0
  %v386 = vadd.f32 0.0, %v385
  %v387 = vpop.f32.mrb[0].mxu0
  %388 = vmatprep.mubr.bf16.mxu0 0
  %389 = vmatmul.mubr.bf16.gmra.mrb[0].mxu0 %v223
  %v390 = vpop.f32.mrb[0].mxu0
  %v391 = vadd.f32 0.0, %v390
  %v392 = vpop.f32.mrb[0].mxu0
  %v393 = vpop.f32.mrb[0].mxu0
  %v394 = vadd.f32 0.0, %v393
  %v395 = vpop.f32.mrb[0].mxu0
  %396 = vmatprep.mubr.bf16.mxu0 0
  %397 = vmatmul.mubr.bf16.gmra.mrb[0].mxu0 %v224
  %v398 = vpop.f32.mrb[0].mxu0
  %v399 = vadd.f32 0.0, %v398
  %v400 = vpop.f32.mrb[0].mxu0
  %v401 = vpop.f32.mrb[0].mxu0
  %v402 = vadd.f32 0.0, %v401
  %v403 = vpop.f32.mrb[0].mxu0
  %404 = vmatprep.mubr.bf16.mxu0 0
  %405 = vmatmul.mubr.bf16.gmra.mrb[0].mxu0 %v225
  %v406 = vpop.f32.mrb[0].mxu0
  %v407 = vadd.f32 0.0, %v406
  %v408 = vpop.f32.mrb[0].mxu0
  %v409 = vpop.f32.mrb[0].mxu0
  %v410 = vadd.f32 0.0, %v409
  %v411 = vpop.f32.mrb[0].mxu0
  %412 = vmatprep.mubr.bf16.mxu0 0
  %413 = vmatmul.mubr.bf16.gmra.mrb[0].mxu0 %v226
  %v414 = vpop.f32.mrb[0].mxu0
  %v415 = vadd.f32 0.0, %v414
  %v416 = vpop.f32.mrb[0].mxu0
  %v417 = vpop.f32.mrb[0].mxu0
  %v418 = vadd.f32 0.0, %v417
  %v419 = vpop.f32.mrb[0].mxu0
  %420 = vmatprep.mubr.bf16.mxu0 0
  %421 = vmatmul.mubr.bf16.gmra.mrb[0].mxu0 %v227
  %v422 = vpop.f32.mrb[0].mxu0
  %v423 = vadd.f32 0.0, %v422
  %v424 = vpop.f32.mrb[0].mxu0
  %v425 = vpop.f32.mrb[0].mxu0
  %v426 = vadd.f32 0.0, %v425
  %v427 = vpop.f32.mrb[0].mxu0
  %428 = vmatprep.mubr.bf16.mxu0 0
  %429 = vmatmul.mubr.bf16.gmra.mrb[0].mxu0 %v228
  %v430 = vpop.f32.mrb[0].mxu0
  %v431 = vadd.f32 0.0, %v430
  %v432 = vpop.f32.mrb[0].mxu0
  %v433 = vpop.f32.mrb[0].mxu0
  %v434 = vadd.f32 0.0, %v433
  %v435 = vpop.f32.mrb[0].mxu0
  %436 = vmatprep.mubr.bf16.mxu0 0
  %437 = vmatmul.mubr.bf16.gmra.mrb[0].mxu0 %v229
  %v438 = vpop.f32.mrb[0].mxu0
  %v439 = vadd.f32 0.0, %v438
  %v440 = vpop.f32.mrb[0].mxu0
  %v441 = vpop.f32.mrb[0].mxu0
  %v442 = vadd.f32 0.0, %v441
  %v443 = vpop.f32.mrb[0].mxu0
  %444 = vmatprep.mubr.bf16.mxu0 0
  %445 = vmatmul.mubr.bf16.gmra.mrb[0].mxu0 %v230
  %v446 = vpop.f32.mrb[0].mxu0
  %v447 = vadd.f32 0.0, %v446
  %v448 = vpop.f32.mrb[0].mxu0
  %v449 = vpop.f32.mrb[0].mxu0
  %v450 = vadd.f32 0.0, %v449
  %v451 = vpop.f32.mrb[0].mxu0
  %452 = vmatprep.mubr.bf16.mxu0 0
  %453 = vmatmul.mubr.bf16.gmra.mrb[0].mxu0 %v231
  %v454 = vpop.f32.mrb[0].mxu0
  %v455 = vadd.f32 0.0, %v454
  %v456 = vpop.f32.mrb[0].mxu0
  %v457 = vpop.f32.mrb[0].mxu0
  %v458 = vadd.f32 0.0, %v457
  %v459 = vpop.f32.mrb[0].mxu0
  %460 = vmatprep.mubr.bf16.mxu0 0
  %461 = vmatmul.mubr.bf16.gmra.mrb[0].mxu0 %v232
  %v462 = vpop.f32.mrb[0].mxu0
  %v463 = vadd.f32 0.0, %v462
  %v464 = vpop.f32.mrb[0].mxu0
  %v465 = vpop.f32.mrb[0].mxu0
  %v466 = vadd.f32 0.0, %v465
  %v467 = vpop.f32.mrb[0].mxu0
  %468 = vmatprep.mubr.bf16.mxu0 0
  %469 = vmatmul.mubr.bf16.gmra.mrb[0].mxu0 %v233
  %v470 = vpop.f32.mrb[0].mxu0
  %v471 = vadd.f32 0.0, %v470
  %v472 = vpop.f32.mrb[0].mxu0
  %v473 = vpop.f32.mrb[0].mxu0
  %v474 = vadd.f32 0.0, %v473
  %v475 = vpop.f32.mrb[0].mxu0
  %476 = vmatprep.mubr.bf16.mxu0 0
  %477 = vmatmul.mubr.bf16.gmra.mrb[0].mxu0 %v234
  %v478 = vpop.f32.mrb[0].mxu0
  %v479 = vadd.f32 0.0, %v478
  %v480 = vpop.f32.mrb[0].mxu0
  %v481 = vpop.f32.mrb[0].mxu0
  %v482 = vadd.f32 0.0, %v481
  %v483 = vpop.f32.mrb[0].mxu0
  %484 = vmatprep.mubr.bf16.mxu0 0
  %485 = vmatmul.mubr.bf16.gmra.mrb[0].mxu0 %v235
  %v486 = vpop.f32.mrb[0].mxu0
  %v487 = vadd.f32 0.0, %v486
  %v488 = vpop.f32.mrb[0].mxu0
  %v489 = vpop.f32.mrb[0].mxu0
  %v490 = vadd.f32 0.0, %v489
  %v491 = vpop.f32.mrb[0].mxu0
  %492 = vmatprep.mubr.bf16.mxu0 0
  %493 = vmatmul.mubr.bf16.gmra.mrb[0].mxu0 %v236
  %v494 = vpop.f32.mrb[0].mxu0
  %v495 = vadd.f32 0.0, %v494
  %v496 = vpop.f32.mrb[0].mxu0
  %v497 = vpop.f32.mrb[0].mxu0
  %v498 = vadd.f32 0.0, %v497
  %v499 = vpop.f32.mrb[0].mxu0
  %500 = vmatprep.mubr.bf16.mxu0 0
  %501 = vmatmul.mubr.bf16.gmra.mrb[0].mxu0 %v237
  %v502 = vpop.f32.mrb[0].mxu0
  %v503 = vadd.f32 0.0, %v502
  %v504 = vpop.f32.mrb[0].mxu0
  %v505 = vpop.f32.mrb[0].mxu0
  %v506 = vadd.f32 0.0, %v505
  %v507 = vpop.f32.mrb[0].mxu0
  %508 = vmatprep.mubr.bf16.mxu0 0
  %509 = vmatmul.mubr.bf16.gmra.mrb[0].mxu0 %v238
  %v510 = vpop.f32.mrb[0].mxu0
  %v511 = vadd.f32 0.0, %v510
  %v512 = vpop.f32.mrb[0].mxu0
  %v513 = vpop.f32.mrb[0].mxu0
  %v514 = vadd.f32 0.0, %v513
  %v515 = vpop.f32.mrb[0].mxu0
  %516 = vmatprep.mubr.bf16.mxu0 0
  %517 = vmatmul.mubr.bf16.gmra.mrb[0].mxu0 %v239
  %v518 = vpop.f32.mrb[0].mxu0
  %v519 = vadd.f32 0.0, %v518
  %v520 = vpop.f32.mrb[0].mxu0
  %v521 = vpop.f32.mrb[0].mxu0
  %v522 = vadd.f32 0.0, %v521
  %v523 = vpop.f32.mrb[0].mxu0
  %524 = vmatprep.mubr.bf16.mxu0 0
  %525 = vmatmul.mubr.bf16.gmra.mrb[0].mxu0 %v240
  %v526 = vpop.f32.mrb[0].mxu0
  %v527 = vadd.f32 0.0, %v526
  %v528 = vpop.f32.mrb[0].mxu0
  %v529 = vpop.f32.mrb[0].mxu0
  %v530 = vadd.f32 0.0, %v529
  %v531 = vpop.f32.mrb[0].mxu0
  %532 = vmatprep.mubr.bf16.mxu0 0
  %533 = vmatmul.mubr.bf16.gmra.mrb[0].mxu0 %v241
  %v534 = vpop.f32.mrb[0].mxu0
  %v535 = vadd.f32 0.0, %v534
  %v536 = vpop.f32.mrb[0].mxu0
  %v537 = vpop.f32.mrb[0].mxu0
  %v538 = vadd.f32 0.0, %v537
  %v539 = vpop.f32.mrb[0].mxu0
  %540 = vmatprep.mubr.bf16.mxu0 0
  %541 = vmatmul.mubr.bf16.gmra.mrb[0].mxu0 %v242
  %v542 = vpop.f32.mrb[0].mxu0
  %v543 = vadd.f32 0.0, %v542
  %v544 = vpop.f32.mrb[0].mxu0
  %v545 = vpop.f32.mrb[0].mxu0
  %v546 = vadd.f32 0.0, %v545
  %v547 = vpop.f32.mrb[0].mxu0
  %548 = vmatprep.mubr.bf16.mxu0 0
  %549 = vmatmul.mubr.bf16.gmra.mrb[0].mxu0 %v243
  %v550 = vpop.f32.mrb[0].mxu0
  %v551 = vadd.f32 0.0, %v550
  %v552 = vpop.f32.mrb[0].mxu0
  %v553 = vpop.f32.mrb[0].mxu0
  %v554 = vadd.f32 0.0, %v553
  %v555 = vpop.f32.mrb[0].mxu0
  %556 = vmatprep.mubr.bf16.mxu0 0
  %557 = vmatmul.mubr.bf16.gmra.mrb[0].mxu0 %v244
  %v558 = vpop.f32.mrb[0].mxu0
  %v559 = vadd.f32 0.0, %v558
  %v560 = vpop.f32.mrb[0].mxu0
  %v561 = vpop.f32.mrb[0].mxu0
  %v562 = vadd.f32 0.0, %v561
  %v563 = vpop.f32.mrb[0].mxu0
  %564 = vmatprep.mubr.bf16.mxu0 0
  %565 = vmatmul.mubr.bf16.gmra.mrb[0].mxu0 %v245
  %v566 = vpop.f32.mrb[0].mxu0
  %v567 = vadd.f32 0.0, %v566
  %v568 = vpop.f32.mrb[0].mxu0
  %v569 = vpop.f32.mrb[0].mxu0
  %v570 = vadd.f32 0.0, %v569
  %v571 = vpop.f32.mrb[0].mxu0
  %572 = vmatprep.mubr.bf16.mxu0 0
  %573 = vmatmul.mubr.bf16.gmra.mrb[0].mxu0 %v246
  %v574 = vpop.f32.mrb[0].mxu0
  %v575 = vadd.f32 0.0, %v574
  %v576 = vpop.f32.mrb[0].mxu0
  %v577 = vpop.f32.mrb[0].mxu0
  %v578 = vadd.f32 0.0, %v577
  %v579 = vpop.f32.mrb[0].mxu0
  %580 = vmatprep.mubr.bf16.mxu0 0
  %581 = vmatmul.mubr.bf16.gmra.mrb[0].mxu0 %v247
  %v582 = vpop.f32.mrb[0].mxu0
  %v583 = vadd.f32 0.0, %v582
  %v584 = vpop.f32.mrb[0].mxu0
  %v585 = vpop.f32.mrb[0].mxu0
  %v586 = vadd.f32 0.0, %v585
  %v587 = vpop.f32.mrb[0].mxu0
  %588 = vmatprep.mubr.bf16.mxu0 0
  %589 = vmatmul.mubr.bf16.gmra.mrb[0].mxu0 %v248
  %v590 = vpop.f32.mrb[0].mxu0
  %v591 = vadd.f32 0.0, %v590
  %v592 = vpop.f32.mrb[0].mxu0
  %v593 = vpop.f32.mrb[0].mxu0
  %v594 = vadd.f32 0.0, %v593
  %v595 = vpop.f32.mrb[0].mxu0
  %596 = vmatprep.mubr.bf16.mxu0 0
  %597 = vmatmul.mubr.bf16.gmra.mrb[0].mxu0 %v249
  %v598 = vpop.f32.mrb[0].mxu0
  %v599 = vadd.f32 0.0, %v598
  %v600 = vpop.f32.mrb[0].mxu0
  %v601 = vpop.f32.mrb[0].mxu0
  %v602 = vadd.f32 0.0, %v601
  %v603 = vpop.f32.mrb[0].mxu0
  %604 = vmatprep.mubr.bf16.mxu0 0
  %605 = vmatmul.mubr.bf16.gmra.mrb[0].mxu0 %v250
  %v606 = vpop.f32.mrb[0].mxu0
  %v607 = vadd.f32 0.0, %v606
  %v608 = vpop.f32.mrb[0].mxu0
  %v609 = vpop.f32.mrb[0].mxu0
  %v610 = vadd.f32 0.0, %v609
  %v611 = vpop.f32.mrb[0].mxu0
  %612 = vmatprep.mubr.bf16.mxu0 0
  %613 = vmatmul.mubr.bf16.gmra.mrb[0].mxu0 %v251
  %v614 = vpop.f32.mrb[0].mxu0
  %v615 = vadd.f32 0.0, %v614
  %v616 = vpop.f32.mrb[0].mxu0
  %v617 = vpop.f32.mrb[0].mxu0
  %v618 = vadd.f32 0.0, %v617
  %v619 = vpop.f32.mrb[0].mxu0
  %620 = vdwg.mxu0
  %vm621 = vcmp.ge.f32.partialorder %v367, 0.0
  %vm622 = vcmp.ge.f32.partialorder %v370, 0.0
  %vm623 = vcmp.ge.f32.partialorder %v375, 0.0
  %vm624 = vcmp.ge.f32.partialorder %v378, 0.0
  %vm625 = vcmp.ge.f32.partialorder %v383, 0.0
  %vm626 = vcmp.ge.f32.partialorder %v386, 0.0
  %vm627 = vcmp.ge.f32.partialorder %v391, 0.0
  %vm628 = vcmp.ge.f32.partialorder %v394, 0.0
  %vm629 = vcmp.ge.f32.partialorder %v399, 0.0
  %vm630 = vcmp.ge.f32.partialorder %v402, 0.0
  %vm631 = vcmp.ge.f32.partialorder %v407, 0.0
  %vm632 = vcmp.ge.f32.partialorder %v410, 0.0
  %vm633 = vcmp.ge.f32.partialorder %v415, 0.0
  %vm634 = vcmp.ge.f32.partialorder %v418, 0.0
  %vm635 = vcmp.ge.f32.partialorder %v423, 0.0
  %vm636 = vcmp.ge.f32.partialorder %v426, 0.0
  %vm637 = vcmp.ge.f32.partialorder %v431, 0.0
  %vm638 = vcmp.ge.f32.partialorder %v434, 0.0
  %vm639 = vcmp.ge.f32.partialorder %v439, 0.0
  %vm640 = vcmp.ge.f32.partialorder %v442, 0.0
  %vm641 = vcmp.ge.f32.partialorder %v447, 0.0
  %vm642 = vcmp.ge.f32.partialorder %v450, 0.0
  %vm643 = vcmp.ge.f32.partialorder %v455, 0.0
  %vm644 = vcmp.ge.f32.partialorder %v458, 0.0
  %vm645 = vcmp.ge.f32.partialorder %v463, 0.0
  %vm646 = vcmp.ge.f32.partialorder %v466, 0.0
  %vm647 = vcmp.ge.f32.partialorder %v471, 0.0
  %vm648 = vcmp.ge.f32.partialorder %v474, 0.0
  %vm649 = vcmp.ge.f32.partialorder %v479, 0.0
  %vm650 = vcmp.ge.f32.partialorder %v482, 0.0
  %vm651 = vcmp.ge.f32.partialorder %v487, 0.0
  %vm652 = vcmp.ge.f32.partialorder %v490, 0.0
  %vm653 = vcmp.ge.f32.partialorder %v495, 0.0
  %vm654 = vcmp.ge.f32.partialorder %v498, 0.0
  %vm655 = vcmp.ge.f32.partialorder %v503, 0.0
  %vm656 = vcmp.ge.f32.partialorder %v506, 0.0
  %vm657 = vcmp.ge.f32.partialorder %v511, 0.0
  %vm658 = vcmp.ge.f32.partialorder %v514, 0.0
  %vm659 = vcmp.ge.f32.partialorder %v519, 0.0
  %vm660 = vcmp.ge.f32.partialorder %v522, 0.0
  %vm661 = vcmp.ge.f32.partialorder %v527, 0.0
  %vm662 = vcmp.ge.f32.partialorder %v530, 0.0
  %vm663 = vcmp.ge.f32.partialorder %v535, 0.0
  %vm664 = vcmp.ge.f32.partialorder %v538, 0.0
  %vm665 = vcmp.ge.f32.partialorder %v543, 0.0
  %vm666 = vcmp.ge.f32.partialorder %v546, 0.0
  %vm667 = vcmp.ge.f32.partialorder %v551, 0.0
  %vm668 = vcmp.ge.f32.partialorder %v554, 0.0
  %vm669 = vcmp.ge.f32.partialorder %v559, 0.0
  %vm670 = vcmp.ge.f32.partialorder %v562, 0.0
  %vm671 = vcmp.ge.f32.partialorder %v567, 0.0
  %vm672 = vcmp.ge.f32.partialorder %v570, 0.0
  %vm673 = vcmp.ge.f32.partialorder %v575, 0.0
  %vm674 = vcmp.ge.f32.partialorder %v578, 0.0
  %vm675 = vcmp.ge.f32.partialorder %v583, 0.0
  %vm676 = vcmp.ge.f32.partialorder %v586, 0.0
  %vm677 = vcmp.ge.f32.partialorder %v591, 0.0
  %vm678 = vcmp.ge.f32.partialorder %v594, 0.0
  %vm679 = vcmp.ge.f32.partialorder %v599, 0.0
  %vm680 = vcmp.ge.f32.partialorder %v602, 0.0
  %vm681 = vcmp.ge.f32.partialorder %v607, 0.0
  %vm682 = vcmp.ge.f32.partialorder %v610, 0.0
  %vm683 = vcmp.ge.f32.partialorder %v615, 0.0
  %vm684 = vcmp.ge.f32.partialorder %v618, 0.0
  %v685 = vmul.f32 %v367, 0.2
  %v686 = vmul.f32 %v370, 0.2
  %v687 = vmul.f32 %v375, 0.2
  %v688 = vmul.f32 %v378, 0.2
  %v689 = vmul.f32 %v383, 0.2
  %v690 = vmul.f32 %v386, 0.2
  %v691 = vmul.f32 %v391, 0.2
  %v692 = vmul.f32 %v394, 0.2
  %v693 = vmul.f32 %v399, 0.2
  %v694 = vmul.f32 %v402, 0.2
  %v695 = vmul.f32 %v407, 0.2
  %v696 = vmul.f32 %v410, 0.2
  %v697 = vmul.f32 %v415, 0.2
  %v698 = vmul.f32 %v418, 0.2
  %v699 = vmul.f32 %v423, 0.2
  %v700 = vmul.f32 %v426, 0.2
  %v701 = vmul.f32 %v431, 0.2
  %v702 = vmul.f32 %v434, 0.2
  %v703 = vmul.f32 %v439, 0.2
  %v704 = vmul.f32 %v442, 0.2
  %v705 = vmul.f32 %v447, 0.2
  %v706 = vmul.f32 %v450, 0.2
  %v707 = vmul.f32 %v455, 0.2
  %v708 = vmul.f32 %v458, 0.2
  %v709 = vmul.f32 %v463, 0.2
  %v710 = vmul.f32 %v466, 0.2
  %v711 = vmul.f32 %v471, 0.2
  %v712 = vmul.f32 %v474, 0.2
  %v713 = vmul.f32 %v479, 0.2
  %v714 = vmul.f32 %v482, 0.2
  %v715 = vmul.f32 %v487, 0.2
  %v716 = vmul.f32 %v490, 0.2
  %v717 = vmul.f32 %v495, 0.2
  %v718 = vmul.f32 %v498, 0.2
  %v719 = vmul.f32 %v503, 0.2
  %v720 = vmul.f32 %v506, 0.2
  %v721 = vmul.f32 %v511, 0.2
  %v722 = vmul.f32 %v514, 0.2
  %v723 = vmul.f32 %v519, 0.2
  %v724 = vmul.f32 %v522, 0.2
  %v725 = vmul.f32 %v527, 0.2
  %v726 = vmul.f32 %v530, 0.2
  %v727 = vmul.f32 %v535, 0.2
  %v728 = vmul.f32 %v538, 0.2
  %v729 = vmul.f32 %v543, 0.2
  %v730 = vmul.f32 %v546, 0.2
  %v731 = vmul.f32 %v551, 0.2
  %v732 = vmul.f32 %v554, 0.2
  %v733 = vmul.f32 %v559, 0.2
  %v734 = vmul.f32 %v562, 0.2
  %v735 = vmul.f32 %v567, 0.2
  %v736 = vmul.f32 %v570, 0.2
  %v737 = vmul.f32 %v575, 0.2
  %v738 = vmul.f32 %v578, 0.2
  %v739 = vmul.f32 %v583, 0.2
  %v740 = vmul.f32 %v586, 0.2
  %v741 = vmul.f32 %v591, 0.2
  %v742 = vmul.f32 %v594, 0.2
  %v743 = vmul.f32 %v599, 0.2
  %v744 = vmul.f32 %v602, 0.2
  %v745 = vmul.f32 %v607, 0.2
  %v746 = vmul.f32 %v610, 0.2
  %v747 = vmul.f32 %v615, 0.2
  %v748 = vmul.f32 %v618, 0.2
  %v749 = vsel %vm621, %v367, %v685
  %v750 = vsel %vm622, %v370, %v686
  %v751 = vsel %vm623, %v375, %v687
  %v752 = vsel %vm624, %v378, %v688
  %v753 = vsel %vm625, %v383, %v689
  %v754 = vsel %vm626, %v386, %v690
  %v755 = vsel %vm627, %v391, %v691
  %v756 = vsel %vm628, %v394, %v692
  %v757 = vsel %vm629, %v399, %v693
  %v758 = vsel %vm630, %v402, %v694
  %v759 = vsel %vm631, %v407, %v695
  %v760 = vsel %vm632, %v410, %v696
  %v761 = vsel %vm633, %v415, %v697
  %v762 = vsel %vm634, %v418, %v698
  %v763 = vsel %vm635, %v423, %v699
  %v764 = vsel %vm636, %v426, %v700
  %v765 = vsel %vm637, %v431, %v701
  %v766 = vsel %vm638, %v434, %v702
  %v767 = vsel %vm639, %v439, %v703
  %v768 = vsel %vm640, %v442, %v704
  %v769 = vsel %vm641, %v447, %v705
  %v770 = vsel %vm642, %v450, %v706
  %v771 = vsel %vm643, %v455, %v707
  %v772 = vsel %vm644, %v458, %v708
  %v773 = vsel %vm645, %v463, %v709
  %v774 = vsel %vm646, %v466, %v710
  %v775 = vsel %vm647, %v471, %v711
  %v776 = vsel %vm648, %v474, %v712
  %v777 = vsel %vm649, %v479, %v713
  %v778 = vsel %vm650, %v482, %v714
  %v779 = vsel %vm651, %v487, %v715
  %v780 = vsel %vm652, %v490, %v716
  %v781 = vsel %vm653, %v495, %v717
  %v782 = vsel %vm654, %v498, %v718
  %v783 = vsel %vm655, %v503, %v719
  %v784 = vsel %vm656, %v506, %v720
  %v785 = vsel %vm657, %v511, %v721
  %v786 = vsel %vm658, %v514, %v722
  %v787 = vsel %vm659, %v519, %v723
  %v788 = vsel %vm660, %v522, %v724
  %v789 = vsel %vm661, %v527, %v725
  %v790 = vsel %vm662, %v530, %v726
  %v791 = vsel %vm663, %v535, %v727
  %v792 = vsel %vm664, %v538, %v728
  %v793 = vsel %vm665, %v543, %v729
  %v794 = vsel %vm666, %v546, %v730
  %v795 = vsel %vm667, %v551, %v731
  %v796 = vsel %vm668, %v554, %v732
  %v797 = vsel %vm669, %v559, %v733
  %v798 = vsel %vm670, %v562, %v734
  %v799 = vsel %vm671, %v567, %v735
  %v800 = vsel %vm672, %v570, %v736
  %v801 = vsel %vm673, %v575, %v737
  %v802 = vsel %vm674, %v578, %v738
  %v803 = vsel %vm675, %v583, %v739
  %v804 = vsel %vm676, %v586, %v740
  %v805 = vsel %vm677, %v591, %v741
  %v806 = vsel %vm678, %v594, %v742
  %v807 = vsel %vm679, %v599, %v743
  %v808 = vsel %vm680, %v602, %v744
  %v809 = vsel %vm681, %v607, %v745
  %v810 = vsel %vm682, %v610, %v746
  %v811 = vsel %vm683, %v615, %v747
  %v812 = vsel %vm684, %v618, %v748
  %v813 = vpack.c.bf16 %v750, %v749
  %v814 = vpack.c.bf16 %v752, %v751
  %v815 = vpack.c.bf16 %v754, %v753
  %v816 = vpack.c.bf16 %v756, %v755
  %v817 = vpack.c.bf16 %v758, %v757
  %v818 = vpack.c.bf16 %v760, %v759
  %v819 = vpack.c.bf16 %v762, %v761
  %v820 = vpack.c.bf16 %v764, %v763
  %v821 = vpack.c.bf16 %v766, %v765
  %v822 = vpack.c.bf16 %v768, %v767
  %v823 = vpack.c.bf16 %v770, %v769
  %v824 = vpack.c.bf16 %v772, %v771
  %v825 = vpack.c.bf16 %v774, %v773
  %v826 = vpack.c.bf16 %v776, %v775
  %v827 = vpack.c.bf16 %v778, %v777
  %v828 = vpack.c.bf16 %v780, %v779
  %v829 = vpack.c.bf16 %v782, %v781
  %v830 = vpack.c.bf16 %v784, %v783
  %v831 = vpack.c.bf16 %v786, %v785
  %v832 = vpack.c.bf16 %v788, %v787
  %v833 = vpack.c.bf16 %v790, %v789
  %v834 = vpack.c.bf16 %v792, %v791
  %v835 = vpack.c.bf16 %v794, %v793
  %v836 = vpack.c.bf16 %v796, %v795
  %v837 = vpack.c.bf16 %v798, %v797
  %v838 = vpack.c.bf16 %v800, %v799
  %v839 = vpack.c.bf16 %v802, %v801
  %v840 = vpack.c.bf16 %v804, %v803
  %v841 = vpack.c.bf16 %v806, %v805
  %v842 = vpack.c.bf16 %v808, %v807
  %v843 = vpack.c.bf16 %v810, %v809
  %v844 = vpack.c.bf16 %v812, %v811
  %v877 = vunpack.c.l.b16 %v813
  %v878 = vunpack.c.h.b16 %v813
  %v879 = vunpack.c.l.b16 %v814
  %v880 = vunpack.c.h.b16 %v814
  %v881 = vunpack.c.l.b16 %v815
  %v882 = vunpack.c.h.b16 %v815
  %v883 = vunpack.c.l.b16 %v816
  %v884 = vunpack.c.h.b16 %v816
  %v885 = vunpack.c.l.b16 %v817
  %v886 = vunpack.c.h.b16 %v817
  %v887 = vunpack.c.l.b16 %v818
  %v888 = vunpack.c.h.b16 %v818
  %v889 = vunpack.c.l.b16 %v819
  %v890 = vunpack.c.h.b16 %v819
  %v891 = vunpack.c.l.b16 %v820
  %v892 = vunpack.c.h.b16 %v820
  %v893 = vunpack.c.l.b16 %v821
  %v894 = vunpack.c.h.b16 %v821
  %v895 = vunpack.c.l.b16 %v822
  %v896 = vunpack.c.h.b16 %v822
  %v897 = vunpack.c.l.b16 %v823
  %v898 = vunpack.c.h.b16 %v823
  %v899 = vunpack.c.l.b16 %v824
  %v900 = vunpack.c.h.b16 %v824
  %v901 = vunpack.c.l.b16 %v825
  %v902 = vunpack.c.h.b16 %v825
  %v903 = vunpack.c.l.b16 %v826
  %v904 = vunpack.c.h.b16 %v826
  %v905 = vunpack.c.l.b16 %v827
  %v906 = vunpack.c.h.b16 %v827
  %v907 = vunpack.c.l.b16 %v828
  %v908 = vunpack.c.h.b16 %v828
  %v909 = vunpack.c.l.b16 %v829
  %v910 = vunpack.c.h.b16 %v829
  %v911 = vunpack.c.l.b16 %v830
  %v912 = vunpack.c.h.b16 %v830
  %v913 = vunpack.c.l.b16 %v831
  %v914 = vunpack.c.h.b16 %v831
  %v915 = vunpack.c.l.b16 %v832
  %v916 = vunpack.c.h.b16 %v832
  %v917 = vunpack.c.l.b16 %v833
  %v918 = vunpack.c.h.b16 %v833
  %v919 = vunpack.c.l.b16 %v834
  %v920 = vunpack.c.h.b16 %v834
  %v921 = vunpack.c.l.b16 %v835
  %v922 = vunpack.c.h.b16 %v835
  %v923 = vunpack.c.l.b16 %v836
  %v924 = vunpack.c.h.b16 %v836
  %v925 = vunpack.c.l.b16 %v837
  %v926 = vunpack.c.h.b16 %v837
  %v927 = vunpack.c.l.b16 %v838
  %v928 = vunpack.c.h.b16 %v838
  %v929 = vunpack.c.l.b16 %v839
  %v930 = vunpack.c.h.b16 %v839
  %v931 = vunpack.c.l.b16 %v840
  %v932 = vunpack.c.h.b16 %v840
  %v933 = vunpack.c.l.b16 %v841
  %v934 = vunpack.c.h.b16 %v841
  %v935 = vunpack.c.l.b16 %v842
  %v936 = vunpack.c.h.b16 %v842
  %v937 = vunpack.c.l.b16 %v843
  %v938 = vunpack.c.h.b16 %v843
  %v939 = vunpack.c.l.b16 %v844
  %v940 = vunpack.c.h.b16 %v844
  %v941 = vpack.c.b16 %v877, %v877
  %v942 = vpack.c.b16 %v878, %v878
  %v943 = vpack.c.b16 %v879, %v879
  %v944 = vpack.c.b16 %v880, %v880
  %v945 = vpack.c.b16 %v881, %v881
  %v946 = vpack.c.b16 %v882, %v882
  %v947 = vpack.c.b16 %v883, %v883
  %v948 = vpack.c.b16 %v884, %v884
  %v949 = vpack.c.b16 %v885, %v885
  %v950 = vpack.c.b16 %v886, %v886
  %v951 = vpack.c.b16 %v887, %v887
  %v952 = vpack.c.b16 %v888, %v888
  %v953 = vpack.c.b16 %v889, %v889
  %v954 = vpack.c.b16 %v890, %v890
  %v955 = vpack.c.b16 %v891, %v891
  %v956 = vpack.c.b16 %v892, %v892
  %v957 = vpack.c.b16 %v893, %v893
  %v958 = vpack.c.b16 %v894, %v894
  %v959 = vpack.c.b16 %v895, %v895
  %v960 = vpack.c.b16 %v896, %v896
  %v961 = vpack.c.b16 %v897, %v897
  %v962 = vpack.c.b16 %v898, %v898
  %v963 = vpack.c.b16 %v899, %v899
  %v964 = vpack.c.b16 %v900, %v900
  %v965 = vpack.c.b16 %v901, %v901
  %v966 = vpack.c.b16 %v902, %v902
  %v967 = vpack.c.b16 %v903, %v903
  %v968 = vpack.c.b16 %v904, %v904
  %v969 = vpack.c.b16 %v905, %v905
  %v970 = vpack.c.b16 %v906, %v906
  %v971 = vpack.c.b16 %v907, %v907
  %v972 = vpack.c.b16 %v908, %v908
  %v973 = vpack.c.b16 %v909, %v909
  %v974 = vpack.c.b16 %v910, %v910
  %v975 = vpack.c.b16 %v911, %v911
  %v976 = vpack.c.b16 %v912, %v912
  %v977 = vpack.c.b16 %v913, %v913
  %v978 = vpack.c.b16 %v914, %v914
  %v979 = vpack.c.b16 %v915, %v915
  %v980 = vpack.c.b16 %v916, %v916
  %v981 = vpack.c.b16 %v917, %v917
  %v982 = vpack.c.b16 %v918, %v918
  %v983 = vpack.c.b16 %v919, %v919
  %v984 = vpack.c.b16 %v920, %v920
  %v985 = vpack.c.b16 %v921, %v921
  %v986 = vpack.c.b16 %v922, %v922
  %v987 = vpack.c.b16 %v923, %v923
  %v988 = vpack.c.b16 %v924, %v924
  %v989 = vpack.c.b16 %v925, %v925
  %v990 = vpack.c.b16 %v926, %v926
  %v991 = vpack.c.b16 %v927, %v927
  %v992 = vpack.c.b16 %v928, %v928
  %v993 = vpack.c.b16 %v929, %v929
  %v994 = vpack.c.b16 %v930, %v930
  %v995 = vpack.c.b16 %v931, %v931
  %v996 = vpack.c.b16 %v932, %v932
  %v997 = vpack.c.b16 %v933, %v933
  %v998 = vpack.c.b16 %v934, %v934
  %v999 = vpack.c.b16 %v935, %v935
  %v1000 = vpack.c.b16 %v936, %v936
  %v1001 = vpack.c.b16 %v937, %v937
  %v1002 = vpack.c.b16 %v938, %v938
  %v1003 = vpack.c.b16 %v939, %v939
  %v1004 = vpack.c.b16 %v940, %v940
  %1069 = vst [vmem:[%s2] sm:$0xf] %v941
  %1070 = vst [vmem:[%s2 + $0x4] sm:$0xf] %v942
  %1071 = vst [vmem:[%s2 + $0x8] sm:$0xf] %v943
  %1072 = vst [vmem:[%s2 + $0xc] sm:$0xf] %v944
  %1073 = vst [vmem:[%s2 + $0x10] sm:$0xf] %v945
  %1074 = vst [vmem:[%s2 + $0x14] sm:$0xf] %v946
  %1075 = vst [vmem:[%s2 + $0x18] sm:$0xf] %v947
  %1076 = vst [vmem:[%s2 + $0x1c] sm:$0xf] %v948
  %1077 = vst [vmem:[%s2 + $0x20] sm:$0xf] %v949
  %1078 = vst [vmem:[%s2 + $0x24] sm:$0xf] %v950
  %1079 = vst [vmem:[%s2 + $0x28] sm:$0xf] %v951
  %1080 = vst [vmem:[%s2 + $0x2c] sm:$0xf] %v952
  %1081 = vst [vmem:[%s2 + $0x30] sm:$0xf] %v953
  %1082 = vst [vmem:[%s2 + $0x34] sm:$0xf] %v954
  %1083 = vst [vmem:[%s2 + $0x38] sm:$0xf] %v955
  %1084 = vst [vmem:[%s2 + $0x3c] sm:$0xf] %v956
  %1085 = vst [vmem:[%s2 + $0x40] sm:$0xf] %v957
  %1086 = vst [vmem:[%s2 + $0x44] sm:$0xf] %v958
  %1087 = vst [vmem:[%s2 + $0x48] sm:$0xf] %v959
  %1088 = vst [vmem:[%s2 + $0x4c] sm:$0xf] %v960
  %1089 = vst [vmem:[%s2 + $0x50] sm:$0xf] %v961
  %1090 = vst [vmem:[%s2 + $0x54] sm:$0xf] %v962
  %1091 = vst [vmem:[%s2 + $0x58] sm:$0xf] %v963
  %1092 = vst [vmem:[%s2 + $0x5c] sm:$0xf] %v964
  %1093 = vst [vmem:[%s2 + $0x60] sm:$0xf] %v965
  %1094 = vst [vmem:[%s2 + $0x64] sm:$0xf] %v966
  %1095 = vst [vmem:[%s2 + $0x68] sm:$0xf] %v967
  %1096 = vst [vmem:[%s2 + $0x6c] sm:$0xf] %v968
  %1097 = vst [vmem:[%s2 + $0x70] sm:$0xf] %v969
  %1098 = vst [vmem:[%s2 + $0x74] sm:$0xf] %v970
  %1099 = vst [vmem:[%s2 + $0x78] sm:$0xf] %v971
  %1100 = vst [vmem:[%s2 + $0x7c] sm:$0xf] %v972
  %1101 = vst [vmem:[%s2 + $0x80] sm:$0xf] %v973
  %1102 = vst [vmem:[%s2 + $0x84] sm:$0xf] %v974
  %1103 = vst [vmem:[%s2 + $0x88] sm:$0xf] %v975
  %1104 = vst [vmem:[%s2 + $0x8c] sm:$0xf] %v976
  %1105 = vst [vmem:[%s2 + $0x90] sm:$0xf] %v977
  %1106 = vst [vmem:[%s2 + $0x94] sm:$0xf] %v978
  %1107 = vst [vmem:[%s2 + $0x98] sm:$0xf] %v979
  %1108 = vst [vmem:[%s2 + $0x9c] sm:$0xf] %v980
  %1109 = vst [vmem:[%s2 + $0xa0] sm:$0xf] %v981
  %1110 = vst [vmem:[%s2 + $0xa4] sm:$0xf] %v982
  %1111 = vst [vmem:[%s2 + $0xa8] sm:$0xf] %v983
  %1112 = vst [vmem:[%s2 + $0xac] sm:$0xf] %v984
  %1113 = vst [vmem:[%s2 + $0xb0] sm:$0xf] %v985
  %1114 = vst [vmem:[%s2 + $0xb4] sm:$0xf] %v986
  %1115 = vst [vmem:[%s2 + $0xb8] sm:$0xf] %v987
  %1116 = vst [vmem:[%s2 + $0xbc] sm:$0xf] %v988
  %1117 = vst [vmem:[%s2 + $0xc0] sm:$0xf] %v989
  %1118 = vst [vmem:[%s2 + $0xc4] sm:$0xf] %v990
  %1119 = vst [vmem:[%s2 + $0xc8] sm:$0xf] %v991
  %1120 = vst [vmem:[%s2 + $0xcc] sm:$0xf] %v992
  %1121 = vst [vmem:[%s2 + $0xd0] sm:$0xf] %v993
  %1122 = vst [vmem:[%s2 + $0xd4] sm:$0xf] %v994
  %1123 = vst [vmem:[%s2 + $0xd8] sm:$0xf] %v995
  %1124 = vst [vmem:[%s2 + $0xdc] sm:$0xf] %v996
  %1125 = vst [vmem:[%s2 + $0xe0] sm:$0xf] %v997
  %1126 = vst [vmem:[%s2 + $0xe4] sm:$0xf] %v998
  %1127 = vst [vmem:[%s2 + $0xe8] sm:$0xf] %v999
  %1128 = vst [vmem:[%s2 + $0xec] sm:$0xf] %v1000
  %1129 = vst [vmem:[%s2 + $0xf0] sm:$0xf] %v1001
  %1130 = vst [vmem:[%s2 + $0xf4] sm:$0xf] %v1002
  %1131 = vst [vmem:[%s2 + $0xf8] sm:$0xf] %v1003
  %1132 = vst [vmem:[%s2 + $0xfc] sm:$0xf] %v1004
  // Predicated region
  $region10: #{netd_forward.7} parent=0 // pred_check
    _
  $region11: #{netd_forward.7} parent=0 // pred_check_branch
    %1134 = sbr.rel (0) target = $region13
  $region12: #{netd_forward.7} parent=0 // pred_region
    _
  $region13: #{netd_forward.7} parent=0 // pred_fallthru
    _
  // Predicated region
  $region14: #{netd_forward.7} parent=0 // pred_check
    _
  $region15: #{netd_forward.7} parent=0 // pred_check_branch
    %1136 = sbr.rel (0) target = $region17
  $region16: #{netd_forward.7} parent=0 // pred_region
    _
  $region17: #{netd_forward.7} parent=0 // pred_fallthru
    _

// kernel: netd_forward.8
$region0: #{netd_forward.8}
  #allocation0 [shape = 'u32[]', space=smem, size = 0x4, offset = 0x4, fixed_abs, tag = 'smem constant byte address 0x4 - core index']
  #allocation1 [shape = 'u32[144,128]{1,0:T(1,128)}', space=vmem, size = 0x12000, scoped, tag = 'internal scratch']
  %s0 = inlined_call_operand.vmem [shape: bf16[128,128], index: 0, kind: input, shape index: {}]
  %s1 = inlined_call_operand.vmem [shape: bf16[128,128], index: 1, kind: input, shape index: {}]
  %s2 = inlined_call_operand.vmem [shape: bf16[128,128], index: 2, kind: output, shape index: {0}]
  %s3 = inlined_call_operand.vmem [shape: f32[1,8,128], index: 3, kind: output, shape index: {1}]
  %4 = xla_tuple %s2, %s3
  %s5 = sld [smem:[#allocation0]]
  $region26: #{netd_forward.8} parent=0
    _
  %s7 = ssub.s32 1, %s5
  %s8 = scalar_select 0, %s7, %s5
  // Predicated region
  $region2: #{netd_forward.8} parent=0 // pred_check
    _
  $region3: #{netd_forward.8} parent=0 // pred_check_branch
    %10 = sbr.rel (0) target = $region5
  $region4: #{netd_forward.8} parent=0 // pred_region
    _
  $region5: #{netd_forward.8} parent=0 // pred_fallthru
    _
  // Predicated region
  $region6: #{netd_forward.8} parent=0 // pred_check
    _
  $region7: #{netd_forward.8} parent=0 // pred_check_branch
    %12 = sbr.rel (0) target = $region9
  $region8: #{netd_forward.8} parent=0 // pred_region
    _
  $region9: #{netd_forward.8} parent=0 // pred_fallthru
    _
  %v14 = vld [vmem:[%s0] sm:$0xf]
  %v15 = vld [vmem:[%s0 + $0x4] sm:$0xf]
  %v16 = vld [vmem:[%s0 + $0x8] sm:$0xf]
  %v17 = vld [vmem:[%s0 + $0xc] sm:$0xf]
  %v18 = vld [vmem:[%s0 + $0x10] sm:$0xf]
  %v19 = vld [vmem:[%s0 + $0x14] sm:$0xf]
  %v20 = vld [vmem:[%s0 + $0x18] sm:$0xf]
  %v21 = vld [vmem:[%s0 + $0x1c] sm:$0xf]
  %v22 = vld [vmem:[%s0 + $0x20] sm:$0xf]
  %v23 = vld [vmem:[%s0 + $0x24] sm:$0xf]
  %v24 = vld [vmem:[%s0 + $0x28] sm:$0xf]
  %v25 = vld [vmem:[%s0 + $0x2c] sm:$0xf]
  %v26 = vld [vmem:[%s0 + $0x30] sm:$0xf]
  %v27 = vld [vmem:[%s0 + $0x34] sm:$0xf]
  %v28 = vld [vmem:[%s0 + $0x38] sm:$0xf]
  %v29 = vld [vmem:[%s0 + $0x3c] sm:$0xf]
  %v30 = vld [vmem:[%s1] sm:$0xf]
  %v31 = vld [vmem:[%s1 + $0x4] sm:$0xf]
  %v32 = vld [vmem:[%s1 + $0x8] sm:$0xf]
  %v33 = vld [vmem:[%s1 + $0xc] sm:$0xf]
  %v34 = vld [vmem:[%s1 + $0x10] sm:$0xf]
  %v35 = vld [vmem:[%s1 + $0x14] sm:$0xf]
  %v36 = vld [vmem:[%s1 + $0x18] sm:$0xf]
  %v37 = vld [vmem:[%s1 + $0x1c] sm:$0xf]
  %v38 = vld [vmem:[%s1 + $0x20] sm:$0xf]
  %v39 = vld [vmem:[%s1 + $0x24] sm:$0xf]
  %v40 = vld [vmem:[%s1 + $0x28] sm:$0xf]
  %v41 = vld [vmem:[%s1 + $0x2c] sm:$0xf]
  %v42 = vld [vmem:[%s1 + $0x30] sm:$0xf]
  %v43 = vld [vmem:[%s1 + $0x34] sm:$0xf]
  %v44 = vld [vmem:[%s1 + $0x38] sm:$0xf]
  %v45 = vld [vmem:[%s1 + $0x3c] sm:$0xf]
  %v62 = vunpack.c.l.b16 %v14
  %v63 = vunpack.c.l.b16 %v15
  %v64 = vunpack.c.l.b16 %v16
  %v65 = vunpack.c.l.b16 %v17
  %v66 = vunpack.c.l.b16 %v18
  %v67 = vunpack.c.l.b16 %v19
  %v68 = vunpack.c.l.b16 %v20
  %v69 = vunpack.c.l.b16 %v21
  %v70 = vunpack.c.l.b16 %v22
  %v71 = vunpack.c.l.b16 %v23
  %v72 = vunpack.c.l.b16 %v24
  %v73 = vunpack.c.l.b16 %v25
  %v74 = vunpack.c.l.b16 %v26
  %v75 = vunpack.c.l.b16 %v27
  %v76 = vunpack.c.l.b16 %v28
  %v77 = vunpack.c.l.b16 %v29
  %v78 = vpack.c.b16 %v63, %v62
  %v79 = vpack.c.b16 %v65, %v64
  %v80 = vpack.c.b16 %v67, %v66
  %v81 = vpack.c.b16 %v69, %v68
  %v82 = vpack.c.b16 %v71, %v70
  %v83 = vpack.c.b16 %v73, %v72
  %v84 = vpack.c.b16 %v75, %v74
  %v85 = vpack.c.b16 %v77, %v76
  %v110 = vunpack.c.l.b16 %v30
  %v111 = vunpack.c.l.b16 %v31
  %v112 = vunpack.c.l.b16 %v32
  %v113 = vunpack.c.l.b16 %v33
  %v114 = vunpack.c.l.b16 %v34
  %v115 = vunpack.c.l.b16 %v35
  %v116 = vunpack.c.l.b16 %v36
  %v117 = vunpack.c.l.b16 %v37
  %v118 = vunpack.c.l.b16 %v38
  %v119 = vunpack.c.l.b16 %v39
  %v120 = vunpack.c.l.b16 %v40
  %v121 = vunpack.c.l.b16 %v41
  %v122 = vunpack.c.l.b16 %v42
  %v123 = vunpack.c.l.b16 %v43
  %v124 = vunpack.c.l.b16 %v44
  %v125 = vunpack.c.l.b16 %v45
  %v126 = vpack.c.b16 %v111, %v110
  %v127 = vpack.c.b16 %v113, %v112
  %v128 = vpack.c.b16 %v115, %v114
  %v129 = vpack.c.b16 %v117, %v116
  %v130 = vpack.c.b16 %v119, %v118
  %v131 = vpack.c.b16 %v121, %v120
  %v132 = vpack.c.b16 %v123, %v122
  %v133 = vpack.c.b16 %v125, %v124
  %142 = vmatprep.subr.bf16.mxu0 0
  %143 = vmatpush1.bf16.msra.mxu0 %v126
  %144 = vmatprep.subr.bf16.mxu0 0
  %145 = vmatpush1.bf16.msra.mxu0 %v127
  %146 = vmatprep.subr.bf16.mxu0 0
  %147 = vmatpush1.bf16.msra.mxu0 %v128
  %148 = vmatprep.subr.bf16.mxu0 0
  %149 = vmatpush1.bf16.msra.mxu0 %v129
  %150 = vmatprep.subr.bf16.mxu0 0
  %151 = vmatpush1.bf16.msra.mxu0 %v130
  %152 = vmatprep.subr.bf16.mxu0 0
  %153 = vmatpush1.bf16.msra.mxu0 %v131
  %154 = vmatprep.subr.bf16.mxu0 0
  %155 = vmatpush1.bf16.msra.mxu0 %v132
  %156 = vmatprep.subr.bf16.mxu0 0
  %157 = vmatpush1.bf16.msra.mxu0 %v133
  %158 = vmatprep.subr.bf16.mxu0 0
  %159 = vmatpush1.bf16.msra.mxu0 0
  %160 = vmatprep.subr.bf16.mxu0 0
  %161 = vmatpush1.bf16.msra.mxu0 0
  %162 = vmatprep.subr.bf16.mxu0 0
  %163 = vmatpush1.bf16.msra.mxu0 0
  %164 = vmatprep.subr.bf16.mxu0 0
  %165 = vmatpush1.bf16.msra.mxu0 0
  %166 = vmatprep.subr.bf16.mxu0 0
  %167 = vmatpush1.bf16.msra.mxu0 0
  %168 = vmatprep.subr.bf16.mxu0 0
  %169 = vmatpush1.bf16.msra.mxu0 0
  %170 = vmatprep.subr.bf16.mxu0 0
  %171 = vmatpush1.bf16.msra.mxu0 0
  %172 = vmatprep.subr.bf16.mxu0 0
  %173 = vmatpush1.bf16.msra.mxu0 0
  %174 = vmatprep.mubr.bf16.mxu0 0
  %175 = vmatmul.mubr.bf16.gmra.mrb[0].mxu0 %v78
  %v176 = vpop.f32.mrb[0].mxu0
  %v177 = vadd.f32 0.0, %v176
  %v178 = vpop.f32.mrb[0].mxu0
  %v179 = vpop.f32.mrb[0].mxu0
  %v180 = vadd.f32 0.0, %v179
  %v181 = vpop.f32.mrb[0].mxu0
  %182 = vmatprep.mubr.bf16.mxu0 0
  %183 = vmatmul.mubr.bf16.gmra.mrb[0].mxu0 %v79
  %v184 = vpop.f32.mrb[0].mxu0
  %v185 = vadd.f32 0.0, %v184
  %v186 = vpop.f32.mrb[0].mxu0
  %v187 = vpop.f32.mrb[0].mxu0
  %v188 = vadd.f32 0.0, %v187
  %v189 = vpop.f32.mrb[0].mxu0
  %190 = vmatprep.mubr.bf16.mxu0 0
  %191 = vmatmul.mubr.bf16.gmra.mrb[0].mxu0 %v80
  %v192 = vpop.f32.mrb[0].mxu0
  %v193 = vadd.f32 0.0, %v192
  %v194 = vpop.f32.mrb[0].mxu0
  %v195 = vpop.f32.mrb[0].mxu0
  %v196 = vadd.f32 0.0, %v195
  %v197 = vpop.f32.mrb[0].mxu0
  %198 = vmatprep.mubr.bf16.mxu0 0
  %199 = vmatmul.mubr.bf16.gmra.mrb[0].mxu0 %v81
  %v200 = vpop.f32.mrb[0].mxu0
  %v201 = vadd.f32 0.0, %v200
  %v202 = vpop.f32.mrb[0].mxu0
  %v203 = vpop.f32.mrb[0].mxu0
  %v204 = vadd.f32 0.0, %v203
  %v205 = vpop.f32.mrb[0].mxu0
  %206 = vmatprep.mubr.bf16.mxu0 0
  %207 = vmatmul.mubr.bf16.gmra.mrb[0].mxu0 %v82
  %v208 = vpop.f32.mrb[0].mxu0
  %v209 = vadd.f32 0.0, %v208
  %v210 = vpop.f32.mrb[0].mxu0
  %v211 = vpop.f32.mrb[0].mxu0
  %v212 = vadd.f32 0.0, %v211
  %v213 = vpop.f32.mrb[0].mxu0
  %214 = vmatprep.mubr.bf16.mxu0 0
  %215 = vmatmul.mubr.bf16.gmra.mrb[0].mxu0 %v83
  %v216 = vpop.f32.mrb[0].mxu0
  %v217 = vadd.f32 0.0, %v216
  %v218 = vpop.f32.mrb[0].mxu0
  %v219 = vpop.f32.mrb[0].mxu0
  %v220 = vadd.f32 0.0, %v219
  %v221 = vpop.f32.mrb[0].mxu0
  %222 = vmatprep.mubr.bf16.mxu0 0
  %223 = vmatmul.mubr.bf16.gmra.mrb[0].mxu0 %v84
  %v224 = vpop.f32.mrb[0].mxu0
  %v225 = vadd.f32 0.0, %v224
  %v226 = vpop.f32.mrb[0].mxu0
  %v227 = vpop.f32.mrb[0].mxu0
  %v228 = vadd.f32 0.0, %v227
  %v229 = vpop.f32.mrb[0].mxu0
  %230 = vmatprep.mubr.bf16.mxu0 0
  %231 = vmatmul.mubr.bf16.gmra.mrb[0].mxu0 %v85
  %v232 = vpop.f32.mrb[0].mxu0
  %v233 = vadd.f32 0.0, %v232
  %v234 = vpop.f32.mrb[0].mxu0
  %v235 = vpop.f32.mrb[0].mxu0
  %v236 = vadd.f32 0.0, %v235
  %v237 = vpop.f32.mrb[0].mxu0
  %238 = vdwg.mxu0
  %v239 = vpack.c.bf16 %v180, %v177
  %v240 = vpack.c.bf16 %v188, %v185
  %v241 = vpack.c.bf16 %v196, %v193
  %v242 = vpack.c.bf16 %v204, %v201
  %v243 = vpack.c.bf16 %v212, %v209
  %v244 = vpack.c.bf16 %v220, %v217
  %v245 = vpack.c.bf16 %v228, %v225
  %v246 = vpack.c.bf16 %v236, %v233
  %v255 = vunpack.c.l.b16 %v239
  %v256 = vunpack.c.h.b16 %v239
  %v257 = vunpack.c.l.b16 %v240
  %v258 = vunpack.c.h.b16 %v240
  %v259 = vunpack.c.l.b16 %v241
  %v260 = vunpack.c.h.b16 %v241
  %v261 = vunpack.c.l.b16 %v242
  %v262 = vunpack.c.h.b16 %v242
  %v263 = vunpack.c.l.b16 %v243
  %v264 = vunpack.c.h.b16 %v243
  %v265 = vunpack.c.l.b16 %v244
  %v266 = vunpack.c.h.b16 %v244
  %v267 = vunpack.c.l.b16 %v245
  %v268 = vunpack.c.h.b16 %v245
  %v269 = vunpack.c.l.b16 %v246
  %v270 = vunpack.c.h.b16 %v246
  %v271 = vpack.c.b16 %v255, %v255
  %v272 = vpack.c.b16 %v256, %v256
  %v273 = vpack.c.b16 %v257, %v257
  %v274 = vpack.c.b16 %v258, %v258
  %v275 = vpack.c.b16 %v259, %v259
  %v276 = vpack.c.b16 %v260, %v260
  %v277 = vpack.c.b16 %v261, %v261
  %v278 = vpack.c.b16 %v262, %v262
  %v279 = vpack.c.b16 %v263, %v263
  %v280 = vpack.c.b16 %v264, %v264
  %v281 = vpack.c.b16 %v265, %v265
  %v282 = vpack.c.b16 %v266, %v266
  %v283 = vpack.c.b16 %v267, %v267
  %v284 = vpack.c.b16 %v268, %v268
  %v285 = vpack.c.b16 %v269, %v269
  %v286 = vpack.c.b16 %v270, %v270
  %303 = vst [vmem:[%s2] sm:$0xf] %v271
  %304 = vst [vmem:[%s2 + $0x4] sm:$0xf] %v272
  %305 = vst [vmem:[%s2 + $0x8] sm:$0xf] %v273
  %306 = vst [vmem:[%s2 + $0xc] sm:$0xf] %v274
  %307 = vst [vmem:[%s2 + $0x10] sm:$0xf] %v275
  %308 = vst [vmem:[%s2 + $0x14] sm:$0xf] %v276
  %309 = vst [vmem:[%s2 + $0x18] sm:$0xf] %v277
  %310 = vst [vmem:[%s2 + $0x1c] sm:$0xf] %v278
  %311 = vst [vmem:[%s2 + $0x20] sm:$0xf] %v279
  %312 = vst [vmem:[%s2 + $0x24] sm:$0xf] %v280
  %313 = vst [vmem:[%s2 + $0x28] sm:$0xf] %v281
  %314 = vst [vmem:[%s2 + $0x2c] sm:$0xf] %v282
  %315 = vst [vmem:[%s2 + $0x30] sm:$0xf] %v283
  %316 = vst [vmem:[%s2 + $0x34] sm:$0xf] %v284
  %317 = vst [vmem:[%s2 + $0x38] sm:$0xf] %v285
  %318 = vst [vmem:[%s2 + $0x3c] sm:$0xf] %v286
  %v319 = vadd.f32 %v177, %v180
  %v320 = vadd.f32 %v319, %v185
  %v321 = vadd.f32 %v320, %v188
  %v322 = vadd.f32 %v321, %v193
  %v323 = vadd.f32 %v322, %v196
  %v324 = vadd.f32 %v323, %v201
  %v325 = vadd.f32 %v324, %v204
  %v326 = vadd.f32 %v325, %v209
  %v327 = vadd.f32 %v326, %v212
  %v328 = vadd.f32 %v327, %v217
  %v329 = vadd.f32 %v328, %v220
  %v330 = vadd.f32 %v329, %v225
  %v331 = vadd.f32 %v330, %v228
  %v332 = vadd.f32 %v331, %v233
  %v333 = vadd.f32 %v332, %v236
  %v334 = vrot.slane %v333, 4
  %v335 = vadd.f32 %v333, %v334
  %v336 = vrot.slane %v335, 2
  %v337 = vadd.f32 %v335, %v336
  %v338 = vrot.slane %v337, 1
  %v339 = vadd.f32 %v337, %v338
  %v340 = vmul.f32 %v177, %v177
  %v341 = vmul.f32 %v180, %v180
  %v342 = vmul.f32 %v185, %v185
  %v343 = vmul.f32 %v188, %v188
  %v344 = vmul.f32 %v193, %v193
  %v345 = vmul.f32 %v196, %v196
  %v346 = vmul.f32 %v201, %v201
  %v347 = vmul.f32 %v204, %v204
  %v348 = vmul.f32 %v209, %v209
  %v349 = vmul.f32 %v212, %v212
  %v350 = vmul.f32 %v217, %v217
  %v351 = vmul.f32 %v220, %v220
  %v352 = vmul.f32 %v225, %v225
  %v353 = vmul.f32 %v228, %v228
  %v354 = vmul.f32 %v233, %v233
  %v355 = vmul.f32 %v236, %v236
  %v356 = vadd.f32 %v340, %v341
  %v357 = vadd.f32 %v356, %v342
  %v358 = vadd.f32 %v357, %v343
  %v359 = vadd.f32 %v358, %v344
  %v360 = vadd.f32 %v359, %v345
  %v361 = vadd.f32 %v360, %v346
  %v362 = vadd.f32 %v361, %v347
  %v363 = vadd.f32 %v362, %v348
  %v364 = vadd.f32 %v363, %v349
  %v365 = vadd.f32 %v364, %v350
  %v366 = vadd.f32 %v365, %v351
  %v367 = vadd.f32 %v366, %v352
  %v368 = vadd.f32 %v367, %v353
  %v369 = vadd.f32 %v368, %v354
  %v370 = vadd.f32 %v369, %v355
  %v371 = vrot.slane %v370, 4
  %v372 = vadd.f32 %v370, %v371
  %v373 = vrot.slane %v372, 2
  %v374 = vadd.f32 %v372, %v373
  %v375 = vrot.slane %v374, 1
  %v376 = vadd.f32 %v374, %v375
  %vm377 = vcmask 1040384
  %v378 = vsel %vm377, %v339, %v376
  %vm379 = vcmask 1041408
  %v380 = vsel %vm379, %v378, 0.0
  %381 = vst [vmem:[%s3] sm:$0xff] %v380
  // Predicated region
  $region10: #{netd_forward.8} parent=0 // pred_check
    _
  $region11: #{netd_forward.8} parent=0 // pred_check_branch
    %383 = sbr.rel (0) target = $region13
  $region12: #{netd_forward.8} parent=0 // pred_region
    _
  $region13: #{netd_forward.8} parent=0 // pred_fallthru
    _
  // Predicated region
  $region14: #{netd_forward.8} parent=0 // pred_check
    _
  $region15: #{netd_forward.8} parent=0 // pred_check_branch
    %385 = sbr.rel (0) target = $region17
  $region16: #{netd_forward.8} parent=0 // pred_region
    _
  $region17: #{netd_forward.8} parent=0 // pred_fallthru
    _
  // Predicated region
  $region18: #{netd_forward.8} parent=0 // pred_check
    _
  $region19: #{netd_forward.8} parent=0 // pred_check_branch
    %387 = sbr.rel (0) target = $region21
  $region20: #{netd_forward.8} parent=0 // pred_region
    _
  $region21: #{netd_forward.8} parent=0 // pred_fallthru
    _
  // Predicated region
  $region22: #{netd_forward.8} parent=0 // pred_check
    _
  $region23: #{netd_forward.8} parent=0 // pred_check_branch
    %389 = sbr.rel (0) target = $region25
  $region24: #{netd_forward.8} parent=0 // pred_region
    _
  $region25: #{netd_forward.8} parent=0 // pred_fallthru
    _

// kernel: netd_forward.9
$region0: #{netd_forward.9}
  #allocation0 [shape = 'u32[]', space=smem, size = 0x4, offset = 0x4, fixed_abs, tag = 'smem constant byte address 0x4 - core index']
  #allocation1 [shape = 'u32[144,128]{1,0:T(1,128)}', space=vmem, size = 0x12000, scoped, tag = 'internal scratch']
  %s0 = inlined_call_operand.vmem [shape: bf16[128,128], index: 0, kind: input, shape index: {}]
  %s1 = inlined_call_operand.vmem [shape: f32[1,128], index: 1, kind: input, shape index: {}]
  %s2 = inlined_call_operand.vmem [shape: f32[1,128], index: 2, kind: input, shape index: {}]
  %s3 = inlined_call_operand.vmem [shape: bf16[128,128], index: 3, kind: output, shape index: {}]
  %s4 = sld [smem:[#allocation0]]
  $region22: #{netd_forward.9} parent=0
    _
  %s6 = ssub.s32 1, %s4
  %s7 = scalar_select 0, %s6, %s4
  // Predicated region
  $region2: #{netd_forward.9} parent=0 // pred_check
    _
  $region3: #{netd_forward.9} parent=0 // pred_check_branch
    %9 = sbr.rel (0) target = $region5
  $region4: #{netd_forward.9} parent=0 // pred_region
    _
  $region5: #{netd_forward.9} parent=0 // pred_fallthru
    _
  // Predicated region
  $region6: #{netd_forward.9} parent=0 // pred_check
    _
  $region7: #{netd_forward.9} parent=0 // pred_check_branch
    %11 = sbr.rel (0) target = $region9
  $region8: #{netd_forward.9} parent=0 // pred_region
    _
  $region9: #{netd_forward.9} parent=0 // pred_fallthru
    _
  // Predicated region
  $region10: #{netd_forward.9} parent=0 // pred_check
    _
  $region11: #{netd_forward.9} parent=0 // pred_check_branch
    %13 = sbr.rel (0) target = $region13
  $region12: #{netd_forward.9} parent=0 // pred_region
    _
  $region13: #{netd_forward.9} parent=0 // pred_fallthru
    _
  %v14 = vld [vmem:[%s0] sm:$0xf]
  %v15 = vld [vmem:[%s0 + $0x4] sm:$0xf]
  %v16 = vld [vmem:[%s0 + $0x8] sm:$0xf]
  %v17 = vld [vmem:[%s0 + $0xc] sm:$0xf]
  %v18 = vld [vmem:[%s0 + $0x10] sm:$0xf]
  %v19 = vld [vmem:[%s0 + $0x14] sm:$0xf]
  %v20 = vld [vmem:[%s0 + $0x18] sm:$0xf]
  %v21 = vld [vmem:[%s0 + $0x1c] sm:$0xf]
  %v22 = vld [vmem:[%s0 + $0x20] sm:$0xf]
  %v23 = vld [vmem:[%s0 + $0x24] sm:$0xf]
  %v24 = vld [vmem:[%s0 + $0x28] sm:$0xf]
  %v25 = vld [vmem:[%s0 + $0x2c] sm:$0xf]
  %v26 = vld [vmem:[%s0 + $0x30] sm:$0xf]
  %v27 = vld [vmem:[%s0 + $0x34] sm:$0xf]
  %v28 = vld [vmem:[%s0 + $0x38] sm:$0xf]
  %v29 = vld [vmem:[%s0 + $0x3c] sm:$0xf]
  %v30 = vunpack.c.l.bf16 %v14
  %v31 = vunpack.c.l.bf16 %v15
  %v32 = vunpack.c.l.bf16 %v16
  %v33 = vunpack.c.l.bf16 %v17
  %v34 = vunpack.c.l.bf16 %v18
  %v35 = vunpack.c.l.bf16 %v19
  %v36 = vunpack.c.l.bf16 %v20
  %v37 = vunpack.c.l.bf16 %v21
  %v38 = vunpack.c.l.bf16 %v22
  %v39 = vunpack.c.l.bf16 %v23
  %v40 = vunpack.c.l.bf16 %v24
  %v41 = vunpack.c.l.bf16 %v25
  %v42 = vunpack.c.l.bf16 %v26
  %v43 = vunpack.c.l.bf16 %v27
  %v44 = vunpack.c.l.bf16 %v28
  %v45 = vunpack.c.l.bf16 %v29
  %v46 = vld [vmem:[%s1] sm:$0x1]
  %v48 = vlaneseq
  %v49 = vshrl.u32 %v48, 7
  %v50 = vsub.s32 0, %v49
  %v51 = vrot.slane %v46, %v50
  %v53 = vmul.f32 %v30, %v51
  %v54 = vmul.f32 %v31, %v51
  %v55 = vmul.f32 %v32, %v51
  %v56 = vmul.f32 %v33, %v51
  %v57 = vmul.f32 %v34, %v51
  %v58 = vmul.f32 %v35, %v51
  %v59 = vmul.f32 %v36, %v51
  %v60 = vmul.f32 %v37, %v51
  %v61 = vmul.f32 %v38, %v51
  %v62 = vmul.f32 %v39, %v51
  %v63 = vmul.f32 %v40, %v51
  %v64 = vmul.f32 %v41, %v51
  %v65 = vmul.f32 %v42, %v51
  %v66 = vmul.f32 %v43, %v51
  %v67 = vmul.f32 %v44, %v51
  %v68 = vmul.f32 %v45, %v51
  %v69 = vld [vmem:[%s2] sm:$0x1]
  %v71 = vlaneseq
  %v72 = vshrl.u32 %v71, 7
  %v73 = vsub.s32 0, %v72
  %v74 = vrot.slane %v69, %v73
  %v76 = vadd.f32 %v53, %v74
  %v77 = vadd.f32 %v54, %v74
  %v78 = vadd.f32 %v55, %v74
  %v79 = vadd.f32 %v56, %v74
  %v80 = vadd.f32 %v57, %v74
  %v81 = vadd.f32 %v58, %v74
  %v82 = vadd.f32 %v59, %v74
  %v83 = vadd.f32 %v60, %v74
  %v84 = vadd.f32 %v61, %v74
  %v85 = vadd.f32 %v62, %v74
  %v86 = vadd.f32 %v63, %v74
  %v87 = vadd.f32 %v64, %v74
  %v88 = vadd.f32 %v65, %v74
  %v89 = vadd.f32 %v66, %v74
  %v90 = vadd.f32 %v67, %v74
  %v91 = vadd.f32 %v68, %v74
  %vm92 = vcmp.ge.f32.partialorder %v76, 0.0
  %vm93 = vcmp.ge.f32.partialorder %v77, 0.0
  %vm94 = vcmp.ge.f32.partialorder %v78, 0.0
  %vm95 = vcmp.ge.f32.partialorder %v79, 0.0
  %vm96 = vcmp.ge.f32.partialorder %v80, 0.0
  %vm97 = vcmp.ge.f32.partialorder %v81, 0.0
  %vm98 = vcmp.ge.f32.partialorder %v82, 0.0
  %vm99 = vcmp.ge.f32.partialorder %v83, 0.0
  %vm100 = vcmp.ge.f32.partialorder %v84, 0.0
  %vm101 = vcmp.ge.f32.partialorder %v85, 0.0
  %vm102 = vcmp.ge.f32.partialorder %v86, 0.0
  %vm103 = vcmp.ge.f32.partialorder %v87, 0.0
  %vm104 = vcmp.ge.f32.partialorder %v88, 0.0
  %vm105 = vcmp.ge.f32.partialorder %v89, 0.0
  %vm106 = vcmp.ge.f32.partialorder %v90, 0.0
  %vm107 = vcmp.ge.f32.partialorder %v91, 0.0
  %v108 = vmul.f32 %v76, 0.2
  %v109 = vmul.f32 %v77, 0.2
  %v110 = vmul.f32 %v78, 0.2
  %v111 = vmul.f32 %v79, 0.2
  %v112 = vmul.f32 %v80, 0.2
  %v113 = vmul.f32 %v81, 0.2
  %v114 = vmul.f32 %v82, 0.2
  %v115 = vmul.f32 %v83, 0.2
  %v116 = vmul.f32 %v84, 0.2
  %v117 = vmul.f32 %v85, 0.2
  %v118 = vmul.f32 %v86, 0.2
  %v119 = vmul.f32 %v87, 0.2
  %v120 = vmul.f32 %v88, 0.2
  %v121 = vmul.f32 %v89, 0.2
  %v122 = vmul.f32 %v90, 0.2
  %v123 = vmul.f32 %v91, 0.2
  %v124 = vsel %vm92, %v76, %v108
  %v125 = vsel %vm93, %v77, %v109
  %v126 = vsel %vm94, %v78, %v110
  %v127 = vsel %vm95, %v79, %v111
  %v128 = vsel %vm96, %v80, %v112
  %v129 = vsel %vm97, %v81, %v113
  %v130 = vsel %vm98, %v82, %v114
  %v131 = vsel %vm99, %v83, %v115
  %v132 = vsel %vm100, %v84, %v116
  %v133 = vsel %vm101, %v85, %v117
  %v134 = vsel %vm102, %v86, %v118
  %v135 = vsel %vm103, %v87, %v119
  %v136 = vsel %vm104, %v88, %v120
  %v137 = vsel %vm105, %v89, %v121
  %v138 = vsel %vm106, %v90, %v122
  %v139 = vsel %vm107, %v91, %v123
  %v140 = vpack.c.bf16 %v125, %v124
  %v141 = vpack.c.bf16 %v127, %v126
  %v142 = vpack.c.bf16 %v129, %v128
  %v143 = vpack.c.bf16 %v131, %v130
  %v144 = vpack.c.bf16 %v133, %v132
  %v145 = vpack.c.bf16 %v135, %v134
  %v146 = vpack.c.bf16 %v137, %v136
  %v147 = vpack.c.bf16 %v139, %v138
  %v156 = vunpack.c.l.b16 %v140
  %v157 = vunpack.c.h.b16 %v140
  %v158 = vunpack.c.l.b16 %v141
  %v159 = vunpack.c.h.b16 %v141
  %v160 = vunpack.c.l.b16 %v142
  %v161 = vunpack.c.h.b16 %v142
  %v162 = vunpack.c.l.b16 %v143
  %v163 = vunpack.c.h.b16 %v143
  %v164 = vunpack.c.l.b16 %v144
  %v165 = vunpack.c.h.b16 %v144
  %v166 = vunpack.c.l.b16 %v145
  %v167 = vunpack.c.h.b16 %v145
  %v168 = vunpack.c.l.b16 %v146
  %v169 = vunpack.c.h.b16 %v146
  %v170 = vunpack.c.l.b16 %v147
  %v171 = vunpack.c.h.b16 %v147
  %v172 = vpack.c.b16 %v156, %v156
  %v173 = vpack.c.b16 %v157, %v157
  %v174 = vpack.c.b16 %v158, %v158
  %v175 = vpack.c.b16 %v159, %v159
  %v176 = vpack.c.b16 %v160, %v160
  %v177 = vpack.c.b16 %v161, %v161
  %v178 = vpack.c.b16 %v162, %v162
  %v179 = vpack.c.b16 %v163, %v163
  %v180 = vpack.c.b16 %v164, %v164
  %v181 = vpack.c.b16 %v165, %v165
  %v182 = vpack.c.b16 %v166, %v166
  %v183 = vpack.c.b16 %v167, %v167
  %v184 = vpack.c.b16 %v168, %v168
  %v185 = vpack.c.b16 %v169, %v169
  %v186 = vpack.c.b16 %v170, %v170
  %v187 = vpack.c.b16 %v171, %v171
  %204 = vst [vmem:[%s3] sm:$0xf] %v172
  %205 = vst [vmem:[%s3 + $0x4] sm:$0xf] %v173
  %206 = vst [vmem:[%s3 + $0x8] sm:$0xf] %v174
  %207 = vst [vmem:[%s3 + $0xc] sm:$0xf] %v175
  %208 = vst [vmem:[%s3 + $0x10] sm:$0xf] %v176
  %209 = vst [vmem:[%s3 + $0x14] sm:$0xf] %v177
  %210 = vst [vmem:[%s3 + $0x18] sm:$0xf] %v178
  %211 = vst [vmem:[%s3 + $0x1c] sm:$0xf] %v179
  %212 = vst [vmem:[%s3 + $0x20] sm:$0xf] %v180
  %213 = vst [vmem:[%s3 + $0x24] sm:$0xf] %v181
  %214 = vst [vmem:[%s3 + $0x28] sm:$0xf] %v182
  %215 = vst [vmem:[%s3 + $0x2c] sm:$0xf] %v183
  %216 = vst [vmem:[%s3 + $0x30] sm:$0xf] %v184
  %217 = vst [vmem:[%s3 + $0x34] sm:$0xf] %v185
  %218 = vst [vmem:[%s3 + $0x38] sm:$0xf] %v186
  %219 = vst [vmem:[%s3 + $0x3c] sm:$0xf] %v187
  // Predicated region
  $region14: #{netd_forward.9} parent=0 // pred_check
    _
  $region15: #{netd_forward.9} parent=0 // pred_check_branch
    %221 = sbr.rel (0) target = $region17
  $region16: #{netd_forward.9} parent=0 // pred_region
    _
  $region17: #{netd_forward.9} parent=0 // pred_fallthru
    _
  // Predicated region
  $region18: #{netd_forward.9} parent=0 // pred_check
    _
  $region19: #{netd_forward.9} parent=0 // pred_check_branch
    %223 = sbr.rel (0) target = $region21
  $region20: #{netd_forward.9} parent=0 // pred_region
    _
  $region21: #{netd_forward.9} parent=0 // pred_fallthru
    _

// kernel: netd_forward.11
$region0: #{netd_forward.11}
  #allocation0 [shape = 'u32[]', space=smem, size = 0x4, offset = 0x4, fixed_abs, tag = 'smem constant byte address 0x4 - core index']
  #allocation1 [shape = 'u32[144,128]{1,0:T(1,128)}', space=vmem, size = 0x12000, scoped, tag = 'internal scratch']
  %s0 = inlined_call_operand.vmem [shape: bf16[32,128], index: 0, kind: input, shape index: {}]
  %s1 = inlined_call_operand.vmem [shape: f32[1,128], index: 1, kind: input, shape index: {}]
  %s2 = inlined_call_operand.vmem [shape: f32[1,128], index: 2, kind: input, shape index: {}]
  %s3 = inlined_call_operand.vmem [shape: bf16[32,128], index: 3, kind: output, shape index: {}]
  %s4 = sld [smem:[#allocation0]]
  $region22: #{netd_forward.11} parent=0
    _
  %s6 = ssub.s32 1, %s4
  %s7 = scalar_select 0, %s6, %s4
  // Predicated region
  $region2: #{netd_forward.11} parent=0 // pred_check
    _
  $region3: #{netd_forward.11} parent=0 // pred_check_branch
    %9 = sbr.rel (0) target = $region5
  $region4: #{netd_forward.11} parent=0 // pred_region
    _
  $region5: #{netd_forward.11} parent=0 // pred_fallthru
    _
  // Predicated region
  $region6: #{netd_forward.11} parent=0 // pred_check
    _
  $region7: #{netd_forward.11} parent=0 // pred_check_branch
    %11 = sbr.rel (0) target = $region9
  $region8: #{netd_forward.11} parent=0 // pred_region
    _
  $region9: #{netd_forward.11} parent=0 // pred_fallthru
    _
  // Predicated region
  $region10: #{netd_forward.11} parent=0 // pred_check
    _
  $region11: #{netd_forward.11} parent=0 // pred_check_branch
    %13 = sbr.rel (0) target = $region13
  $region12: #{netd_forward.11} parent=0 // pred_region
    _
  $region13: #{netd_forward.11} parent=0 // pred_fallthru
    _
  %v14 = vld [vmem:[%s0] sm:$0xf]
  %v15 = vld [vmem:[%s0 + $0x4] sm:$0xf]
  %v16 = vld [vmem:[%s0 + $0x8] sm:$0xf]
  %v17 = vld [vmem:[%s0 + $0xc] sm:$0xf]
  %v18 = vunpack.c.l.bf16 %v14
  %v19 = vunpack.c.l.bf16 %v15
  %v20 = vunpack.c.l.bf16 %v16
  %v21 = vunpack.c.l.bf16 %v17
  %v22 = vld [vmem:[%s1] sm:$0x1]
  %v24 = vlaneseq
  %v25 = vshrl.u32 %v24, 7
  %v26 = vsub.s32 0, %v25
  %v27 = vrot.slane %v22, %v26
  %v29 = vmul.f32 %v18, %v27
  %v30 = vmul.f32 %v19, %v27
  %v31 = vmul.f32 %v20, %v27
  %v32 = vmul.f32 %v21, %v27
  %v33 = vld [vmem:[%s2] sm:$0x1]
  %v35 = vlaneseq
  %v36 = vshrl.u32 %v35, 7
  %v37 = vsub.s32 0, %v36
  %v38 = vrot.slane %v33, %v37
  %v40 = vadd.f32 %v29, %v38
  %v41 = vadd.f32 %v30, %v38
  %v42 = vadd.f32 %v31, %v38
  %v43 = vadd.f32 %v32, %v38
  %vm44 = vcmp.ge.f32.partialorder %v40, 0.0
  %vm45 = vcmp.ge.f32.partialorder %v41, 0.0
  %vm46 = vcmp.ge.f32.partialorder %v42, 0.0
  %vm47 = vcmp.ge.f32.partialorder %v43, 0.0
  %v48 = vmul.f32 %v40, 0.2
  %v49 = vmul.f32 %v41, 0.2
  %v50 = vmul.f32 %v42, 0.2
  %v51 = vmul.f32 %v43, 0.2
  %v52 = vsel %vm44, %v40, %v48
  %v53 = vsel %vm45, %v41, %v49
  %v54 = vsel %vm46, %v42, %v50
  %v55 = vsel %vm47, %v43, %v51
  %v56 = vpack.c.bf16 %v53, %v52
  %v57 = vpack.c.bf16 %v55, %v54
  %v60 = vunpack.c.l.b16 %v56
  %v61 = vunpack.c.h.b16 %v56
  %v62 = vunpack.c.l.b16 %v57
  %v63 = vunpack.c.h.b16 %v57
  %v64 = vpack.c.b16 %v60, %v60
  %v65 = vpack.c.b16 %v61, %v61
  %v66 = vpack.c.b16 %v62, %v62
  %v67 = vpack.c.b16 %v63, %v63
  %72 = vst [vmem:[%s3] sm:$0xf] %v64
  %73 = vst [vmem:[%s3 + $0x4] sm:$0xf] %v65
  %74 = vst [vmem:[%s3 + $0x8] sm:$0xf] %v66
  %75 = vst [vmem:[%s3 + $0xc] sm:$0xf] %v67
  // Predicated region
  $region14: #{netd_forward.11} parent=0 // pred_check
    _
  $region15: #{netd_forward.11} parent=0 // pred_check_branch
    %77 = sbr.rel (0) target = $region17
  $region16: #{netd_forward.11} parent=0 // pred_region
    _
  $region17: #{netd_forward.11} parent=0 // pred_fallthru
    _
  // Predicated region
  $region18: #{netd_forward.11} parent=0 // pred_check
    _
  $region19: #{netd_forward.11} parent=0 // pred_check_branch
    %79 = sbr.rel (0) target = $region21
  $region20: #{netd_forward.11} parent=0 // pred_region
    _
  $region21: #{netd_forward.11} parent=0 // pred_fallthru
    _

// kernel: netd_forward.10
$region0: #{netd_forward.10}
  #allocation0 [shape = 'u32[]', space=smem, size = 0x4, offset = 0x4, fixed_abs, tag = 'smem constant byte address 0x4 - core index']
  #allocation1 [shape = 'u32[144,128]{1,0:T(1,128)}', space=vmem, size = 0x12000, scoped, tag = 'internal scratch']
  %s0 = inlined_call_operand.vmem [shape: bf16[32,256], index: 0, kind: input, shape index: {}]
  %s1 = inlined_call_operand.vmem [shape: bf16[256,128], index: 1, kind: input, shape index: {}]
  %s2 = inlined_call_operand.vmem [shape: bf16[32,128], index: 2, kind: output, shape index: {0}]
  %s3 = inlined_call_operand.vmem [shape: f32[1,8,128], index: 3, kind: output, shape index: {1}]
  %4 = xla_tuple %s2, %s3
  %s5 = sld [smem:[#allocation0]]
  $region26: #{netd_forward.10} parent=0
    _
  %s7 = ssub.s32 1, %s5
  %s8 = scalar_select 0, %s7, %s5
  // Predicated region
  $region2: #{netd_forward.10} parent=0 // pred_check
    _
  $region3: #{netd_forward.10} parent=0 // pred_check_branch
    %10 = sbr.rel (0) target = $region5
  $region4: #{netd_forward.10} parent=0 // pred_region
    _
  $region5: #{netd_forward.10} parent=0 // pred_fallthru
    _
  // Predicated region
  $region6: #{netd_forward.10} parent=0 // pred_check
    _
  $region7: #{netd_forward.10} parent=0 // pred_check_branch
    %12 = sbr.rel (0) target = $region9
  $region8: #{netd_forward.10} parent=0 // pred_region
    _
  $region9: #{netd_forward.10} parent=0 // pred_fallthru
    _
  %v14 = vld [vmem:[%s0] sm:$0xff]
  %v15 = vld [vmem:[%s0 + $0x8] sm:$0xff]
  %v16 = vld [vmem:[%s0 + $0x10] sm:$0xff]
  %v17 = vld [vmem:[%s0 + $0x18] sm:$0xff]
  %v18 = vld [vmem:[%s1] sm:$0xf]
  %v19 = vld [vmem:[%s1 + $0x4] sm:$0xf]
  %v20 = vld [vmem:[%s1 + $0x8] sm:$0xf]
  %v21 = vld [vmem:[%s1 + $0xc] sm:$0xf]
  %v22 = vld [vmem:[%s1 + $0x10] sm:$0xf]
  %v23 = vld [vmem:[%s1 + $0x14] sm:$0xf]
  %v24 = vld [vmem:[%s1 + $0x18] sm:$0xf]
  %v25 = vld [vmem:[%s1 + $0x1c] sm:$0xf]
  %v26 = vld [vmem:[%s1 + $0x20] sm:$0xf]
  %v27 = vld [vmem:[%s1 + $0x24] sm:$0xf]
  %v28 = vld [vmem:[%s1 + $0x28] sm:$0xf]
  %v29 = vld [vmem:[%s1 + $0x2c] sm:$0xf]
  %v30 = vld [vmem:[%s1 + $0x30] sm:$0xf]
  %v31 = vld [vmem:[%s1 + $0x34] sm:$0xf]
  %v32 = vld [vmem:[%s1 + $0x38] sm:$0xf]
  %v33 = vld [vmem:[%s1 + $0x3c] sm:$0xf]
  %v34 = vld [vmem:[%s1 + $0x40] sm:$0xf]
  %v35 = vld [vmem:[%s1 + $0x44] sm:$0xf]
  %v36 = vld [vmem:[%s1 + $0x48] sm:$0xf]
  %v37 = vld [vmem:[%s1 + $0x4c] sm:$0xf]
  %v38 = vld [vmem:[%s1 + $0x50] sm:$0xf]
  %v39 = vld [vmem:[%s1 + $0x54] sm:$0xf]
  %v40 = vld [vmem:[%s1 + $0x58] sm:$0xf]
  %v41 = vld [vmem:[%s1 + $0x5c] sm:$0xf]
  %v42 = vld [vmem:[%s1 + $0x60] sm:$0xf]
  %v43 = vld [vmem:[%s1 + $0x64] sm:$0xf]
  %v44 = vld [vmem:[%s1 + $0x68] sm:$0xf]
  %v45 = vld [vmem:[%s1 + $0x6c] sm:$0xf]
  %v46 = vld [vmem:[%s1 + $0x70] sm:$0xf]
  %v47 = vld [vmem:[%s1 + $0x74] sm:$0xf]
  %v48 = vld [vmem:[%s1 + $0x78] sm:$0xf]
  %v49 = vld [vmem:[%s1 + $0x7c] sm:$0xf]
  %v54 = vunpack.c.l.b16 %v14
  %v55 = vunpack.c.h.b16 %v14
  %v56 = vunpack.c.l.b16 %v15
  %v57 = vunpack.c.h.b16 %v15
  %v58 = vunpack.c.l.b16 %v16
  %v59 = vunpack.c.h.b16 %v16
  %v60 = vunpack.c.l.b16 %v17
  %v61 = vunpack.c.h.b16 %v17
  %v62 = vpack.c.b16 %v56, %v54
  %v63 = vpack.c.b16 %v57, %v55
  %v64 = vpack.c.b16 %v60, %v58
  %v65 = vpack.c.b16 %v61, %v59
  %v102 = vunpack.c.l.b16 %v18
  %v103 = vunpack.c.l.b16 %v19
  %v104 = vunpack.c.l.b16 %v20
  %v105 = vunpack.c.l.b16 %v21
  %v106 = vunpack.c.l.b16 %v22
  %v107 = vunpack.c.l.b16 %v23
  %v108 = vunpack.c.l.b16 %v24
  %v109 = vunpack.c.l.b16 %v25
  %v110 = vunpack.c.l.b16 %v26
  %v111 = vunpack.c.l.b16 %v27
  %v112 = vunpack.c.l.b16 %v28
  %v113 = vunpack.c.l.b16 %v29
  %v114 = vunpack.c.l.b16 %v30
  %v115 = vunpack.c.l.b16 %v31
  %v116 = vunpack.c.l.b16 %v32
  %v117 = vunpack.c.l.b16 %v33
  %v118 = vunpack.c.l.b16 %v34
  %v119 = vunpack.c.l.b16 %v35
  %v120 = vunpack.c.l.b16 %v36
  %v121 = vunpack.c.l.b16 %v37
  %v122 = vunpack.c.l.b16 %v38
  %v123 = vunpack.c.l.b16 %v39
  %v124 = vunpack.c.l.b16 %v40
  %v125 = vunpack.c.l.b16 %v41
  %v126 = vunpack.c.l.b16 %v42
  %v127 = vunpack.c.l.b16 %v43
  %v128 = vunpack.c.l.b16 %v44
  %v129 = vunpack.c.l.b16 %v45
  %v130 = vunpack.c.l.b16 %v46
  %v131 = vunpack.c.l.b16 %v47
  %v132 = vunpack.c.l.b16 %v48
  %v133 = vunpack.c.l.b16 %v49
  %v134 = vpack.c.b16 %v103, %v102
  %v135 = vpack.c.b16 %v105, %v104
  %v136 = vpack.c.b16 %v107, %v106
  %v137 = vpack.c.b16 %v109, %v108
  %v138 = vpack.c.b16 %v111, %v110
  %v139 = vpack.c.b16 %v113, %v112
  %v140 = vpack.c.b16 %v115, %v114
  %v141 = vpack.c.b16 %v117, %v116
  %v142 = vpack.c.b16 %v119, %v118
  %v143 = vpack.c.b16 %v121, %v120
  %v144 = vpack.c.b16 %v123, %v122
  %v145 = vpack.c.b16 %v125, %v124
  %v146 = vpack.c.b16 %v127, %v126
  %v147 = vpack.c.b16 %v129, %v128
  %v148 = vpack.c.b16 %v131, %v130
  %v149 = vpack.c.b16 %v133, %v132
  %166 = vmatprep.subr.bf16.mxu0 0
  %167 = vmatpush1.bf16.msra.mxu0 %v134
  %168 = vmatprep.subr.bf16.mxu0 0
  %169 = vmatpush1.bf16.msra.mxu0 %v135
  %170 = vmatprep.subr.bf16.mxu0 0
  %171 = vmatpush1.bf16.msra.mxu0 %v136
  %172 = vmatprep.subr.bf16.mxu0 0
  %173 = vmatpush1.bf16.msra.mxu0 %v137
  %174 = vmatprep.subr.bf16.mxu0 0
  %175 = vmatpush1.bf16.msra.mxu0 %v138
  %176 = vmatprep.subr.bf16.mxu0 0
  %177 = vmatpush1.bf16.msra.mxu0 %v139
  %178 = vmatprep.subr.bf16.mxu0 0
  %179 = vmatpush1.bf16.msra.mxu0 %v140
  %180 = vmatprep.subr.bf16.mxu0 0
  %181 = vmatpush1.bf16.msra.mxu0 %v141
  %182 = vmatprep.subr.bf16.mxu0 0
  %183 = vmatpush1.bf16.msra.mxu0 %v142
  %184 = vmatprep.subr.bf16.mxu0 0
  %185 = vmatpush1.bf16.msra.mxu0 %v143
  %186 = vmatprep.subr.bf16.mxu0 0
  %187 = vmatpush1.bf16.msra.mxu0 %v144
  %188 = vmatprep.subr.bf16.mxu0 0
  %189 = vmatpush1.bf16.msra.mxu0 %v145
  %190 = vmatprep.subr.bf16.mxu0 0
  %191 = vmatpush1.bf16.msra.mxu0 %v146
  %192 = vmatprep.subr.bf16.mxu0 0
  %193 = vmatpush1.bf16.msra.mxu0 %v147
  %194 = vmatprep.subr.bf16.mxu0 0
  %195 = vmatpush1.bf16.msra.mxu0 %v148
  %196 = vmatprep.subr.bf16.mxu0 0
  %197 = vmatpush1.bf16.msra.mxu0 %v149
  %198 = vmatprep.mubr.bf16.mxu0 %v63
  %199 = vmatmul.mubr.bf16.gmra.mrb[0].mxu0 %v62
  %v200 = vpop.f32.mrb[0].mxu0
  %v201 = vadd.f32 0.0, %v200
  %v202 = vpop.f32.mrb[0].mxu0
  %v203 = vpop.f32.mrb[0].mxu0
  %v204 = vadd.f32 0.0, %v203
  %v205 = vpop.f32.mrb[0].mxu0
  %206 = vmatprep.mubr.bf16.mxu0 %v65
  %207 = vmatmul.mubr.bf16.gmra.mrb[0].mxu0 %v64
  %v208 = vpop.f32.mrb[0].mxu0
  %v209 = vadd.f32 0.0, %v208
  %v210 = vpop.f32.mrb[0].mxu0
  %v211 = vpop.f32.mrb[0].mxu0
  %v212 = vadd.f32 0.0, %v211
  %v213 = vpop.f32.mrb[0].mxu0
  %214 = vdwg.mxu0
  %v215 = vpack.c.bf16 %v204, %v201
  %v216 = vpack.c.bf16 %v212, %v209
  %v219 = vunpack.c.l.b16 %v215
  %v220 = vunpack.c.h.b16 %v215
  %v221 = vunpack.c.l.b16 %v216
  %v222 = vunpack.c.h.b16 %v216
  %v223 = vpack.c.b16 %v219, %v219
  %v224 = vpack.c.b16 %v220, %v220
  %v225 = vpack.c.b16 %v221, %v221
  %v226 = vpack.c.b16 %v222, %v222
  %231 = vst [vmem:[%s2] sm:$0xf] %v223
  %232 = vst [vmem:[%s2 + $0x4] sm:$0xf] %v224
  %233 = vst [vmem:[%s2 + $0x8] sm:$0xf] %v225
  %234 = vst [vmem:[%s2 + $0xc] sm:$0xf] %v226
  %v235 = vadd.f32 %v201, %v204
  %v236 = vadd.f32 %v235, %v209
  %v237 = vadd.f32 %v236, %v212
  %v238 = vrot.slane %v237, 4
  %v239 = vadd.f32 %v237, %v238
  %v240 = vrot.slane %v239, 2
  %v241 = vadd.f32 %v239, %v240
  %v242 = vrot.slane %v241, 1
  %v243 = vadd.f32 %v241, %v242
  %v244 = vmul.f32 %v201, %v201
  %v245 = vmul.f32 %v204, %v204
  %v246 = vmul.f32 %v209, %v209
  %v247 = vmul.f32 %v212, %v212
  %v248 = vadd.f32 %v244, %v245
  %v249 = vadd.f32 %v248, %v246
  %v250 = vadd.f32 %v249, %v247
  %v251 = vrot.slane %v250, 4
  %v252 = vadd.f32 %v250, %v251
  %v253 = vrot.slane %v252, 2
  %v254 = vadd.f32 %v252, %v253
  %v255 = vrot.slane %v254, 1
  %v256 = vadd.f32 %v254, %v255
  %vm257 = vcmask 1040384
  %v258 = vsel %vm257, %v243, %v256
  %vm259 = vcmask 1041408
  %v260 = vsel %vm259, %v258, 0.0
  %261 = vst [vmem:[%s3] sm:$0xff] %v260
  // Predicated region
  $region10: #{netd_forward.10} parent=0 // pred_check
    _
  $region11: #{netd_forward.10} parent=0 // pred_check_branch
    %263 = sbr.rel (0) target = $region13
  $region12: #{netd_forward.10} parent=0 // pred_region
    _
  $region13: #{netd_forward.10} parent=0 // pred_fallthru
    _
  // Predicated region
  $region14: #{netd_forward.10} parent=0 // pred_check
    _
  $region15: #{netd_forward.10} parent=0 // pred_check_branch
    %265 = sbr.rel (0) target = $region17
  $region16: #{netd_forward.10} parent=0 // pred_region
    _
  $region17: #{netd_forward.10} parent=0 // pred_fallthru
    _
  // Predicated region
  $region18: #{netd_forward.10} parent=0 // pred_check
    _
  $region19: #{netd_forward.10} parent=0 // pred_check_branch
    %267 = sbr.rel (0) target = $region21
  $region20: #{netd_forward.10} parent=0 // pred_region
    _
  $region21: #{netd_forward.10} parent=0 // pred_fallthru
    _
  // Predicated region
  $region22: #{netd_forward.10} parent=0 // pred_check
    _
  $region23: #{netd_forward.10} parent=0 // pred_check_branch
    %269 = sbr.rel (0) target = $region25
  $region24: #{netd_forward.10} parent=0 // pred_region
    _
  $region25: #{netd_forward.10} parent=0 // pred_fallthru
    _

// kernel: netd_forward.13
$region0: #{netd_forward.13}
  #allocation0 [shape = 'u32[]', space=smem, size = 0x4, offset = 0x4, fixed_abs, tag = 'smem constant byte address 0x4 - core index']
  #allocation1 [shape = 'u32[144,128]{1,0:T(1,128)}', space=vmem, size = 0x12000, scoped, tag = 'internal scratch']
  %s0 = inlined_call_operand.vmem [shape: bf16[16,128], index: 0, kind: input, shape index: {}]
  %s1 = inlined_call_operand.vmem [shape: f32[1,128], index: 1, kind: input, shape index: {}]
  %s2 = inlined_call_operand.vmem [shape: f32[1,128], index: 2, kind: input, shape index: {}]
  %s3 = inlined_call_operand.vmem [shape: bf16[16,128], index: 3, kind: output, shape index: {}]
  %s4 = sld [smem:[#allocation0]]
  $region22: #{netd_forward.13} parent=0
    _
  %s6 = ssub.s32 1, %s4
  %s7 = scalar_select 0, %s6, %s4
  // Predicated region
  $region2: #{netd_forward.13} parent=0 // pred_check
    _
  $region3: #{netd_forward.13} parent=0 // pred_check_branch
    %9 = sbr.rel (0) target = $region5
  $region4: #{netd_forward.13} parent=0 // pred_region
    _
  $region5: #{netd_forward.13} parent=0 // pred_fallthru
    _
  // Predicated region
  $region6: #{netd_forward.13} parent=0 // pred_check
    _
  $region7: #{netd_forward.13} parent=0 // pred_check_branch
    %11 = sbr.rel (0) target = $region9
  $region8: #{netd_forward.13} parent=0 // pred_region
    _
  $region9: #{netd_forward.13} parent=0 // pred_fallthru
    _
  // Predicated region
  $region10: #{netd_forward.13} parent=0 // pred_check
    _
  $region11: #{netd_forward.13} parent=0 // pred_check_branch
    %13 = sbr.rel (0) target = $region13
  $region12: #{netd_forward.13} parent=0 // pred_region
    _
  $region13: #{netd_forward.13} parent=0 // pred_fallthru
    _
  %v14 = vld [vmem:[%s0] sm:$0xf]
  %v15 = vld [vmem:[%s0 + $0x4] sm:$0xf]
  %v16 = vunpack.c.l.bf16 %v14
  %v17 = vunpack.c.l.bf16 %v15
  %v18 = vld [vmem:[%s1] sm:$0x1]
  %v20 = vlaneseq
  %v21 = vshrl.u32 %v20, 7
  %v22 = vsub.s32 0, %v21
  %v23 = vrot.slane %v18, %v22
  %v25 = vmul.f32 %v16, %v23
  %v26 = vmul.f32 %v17, %v23
  %v27 = vld [vmem:[%s2] sm:$0x1]
  %v29 = vlaneseq
  %v30 = vshrl.u32 %v29, 7
  %v31 = vsub.s32 0, %v30
  %v32 = vrot.slane %v27, %v31
  %v34 = vadd.f32 %v25, %v32
  %v35 = vadd.f32 %v26, %v32
  %vm36 = vcmp.ge.f32.partialorder %v34, 0.0
  %vm37 = vcmp.ge.f32.partialorder %v35, 0.0
  %v38 = vmul.f32 %v34, 0.2
  %v39 = vmul.f32 %v35, 0.2
  %v40 = vsel %vm36, %v34, %v38
  %v41 = vsel %vm37, %v35, %v39
  %v42 = vpack.c.bf16 %v41, %v40
  %v44 = vunpack.c.l.b16 %v42
  %v45 = vunpack.c.h.b16 %v42
  %v46 = vpack.c.b16 %v44, %v44
  %v47 = vpack.c.b16 %v45, %v45
  %50 = vst [vmem:[%s3] sm:$0xf] %v46
  %51 = vst [vmem:[%s3 + $0x4] sm:$0xf] %v47
  // Predicated region
  $region14: #{netd_forward.13} parent=0 // pred_check
    _
  $region15: #{netd_forward.13} parent=0 // pred_check_branch
    %53 = sbr.rel (0) target = $region17
  $region16: #{netd_forward.13} parent=0 // pred_region
    _
  $region17: #{netd_forward.13} parent=0 // pred_fallthru
    _
  // Predicated region
  $region18: #{netd_forward.13} parent=0 // pred_check
    _
  $region19: #{netd_forward.13} parent=0 // pred_check_branch
    %55 = sbr.rel (0) target = $region21
  $region20: #{netd_forward.13} parent=0 // pred_region
    _
  $region21: #{netd_forward.13} parent=0 // pred_fallthru
    _

// kernel: netd_forward.12
$region0: #{netd_forward.12}
  #allocation0 [shape = 'u32[]', space=smem, size = 0x4, offset = 0x4, fixed_abs, tag = 'smem constant byte address 0x4 - core index']
  #allocation1 [shape = 'u32[144,128]{1,0:T(1,128)}', space=vmem, size = 0x12000, scoped, tag = 'internal scratch']
  %s0 = inlined_call_operand.vmem [shape: bf16[16,512], index: 0, kind: input, shape index: {}]
  %s1 = inlined_call_operand.vmem [shape: bf16[512,128], index: 1, kind: input, shape index: {}]
  %s2 = inlined_call_operand.vmem [shape: bf16[16,128], index: 2, kind: output, shape index: {0}]
  %s3 = inlined_call_operand.vmem [shape: f32[1,8,128], index: 3, kind: output, shape index: {1}]
  %4 = xla_tuple %s2, %s3
  %s5 = sld [smem:[#allocation0]]
  $region26: #{netd_forward.12} parent=0
    _
  %s7 = ssub.s32 1, %s5
  %s8 = scalar_select 0, %s7, %s5
  // Predicated region
  $region2: #{netd_forward.12} parent=0 // pred_check
    _
  $region3: #{netd_forward.12} parent=0 // pred_check_branch
    %10 = sbr.rel (0) target = $region5
  $region4: #{netd_forward.12} parent=0 // pred_region
    _
  $region5: #{netd_forward.12} parent=0 // pred_fallthru
    _
  // Predicated region
  $region6: #{netd_forward.12} parent=0 // pred_check
    _
  $region7: #{netd_forward.12} parent=0 // pred_check_branch
    %12 = sbr.rel (0) target = $region9
  $region8: #{netd_forward.12} parent=0 // pred_region
    _
  $region9: #{netd_forward.12} parent=0 // pred_fallthru
    _
  %v14 = vld [vmem:[%s0] sm:$0xff]
  %v15 = vld [vmem:[%s0 + $0x8] sm:$0xff]
  %v16 = vld [vmem:[%s0 + $0x10] sm:$0xff]
  %v17 = vld [vmem:[%s0 + $0x18] sm:$0xff]
  %v18 = vld [vmem:[%s1] sm:$0xf]
  %v19 = vld [vmem:[%s1 + $0x4] sm:$0xf]
  %v20 = vld [vmem:[%s1 + $0x8] sm:$0xf]
  %v21 = vld [vmem:[%s1 + $0xc] sm:$0xf]
  %v22 = vld [vmem:[%s1 + $0x10] sm:$0xf]
  %v23 = vld [vmem:[%s1 + $0x14] sm:$0xf]
  %v24 = vld [vmem:[%s1 + $0x18] sm:$0xf]
  %v25 = vld [vmem:[%s1 + $0x1c] sm:$0xf]
  %v26 = vld [vmem:[%s1 + $0x20] sm:$0xf]
  %v27 = vld [vmem:[%s1 + $0x24] sm:$0xf]
  %v28 = vld [vmem:[%s1 + $0x28] sm:$0xf]
  %v29 = vld [vmem:[%s1 + $0x2c] sm:$0xf]
  %v30 = vld [vmem:[%s1 + $0x30] sm:$0xf]
  %v31 = vld [vmem:[%s1 + $0x34] sm:$0xf]
  %v32 = vld [vmem:[%s1 + $0x38] sm:$0xf]
  %v33 = vld [vmem:[%s1 + $0x3c] sm:$0xf]
  %v34 = vld [vmem:[%s1 + $0x40] sm:$0xf]
  %v35 = vld [vmem:[%s1 + $0x44] sm:$0xf]
  %v36 = vld [vmem:[%s1 + $0x48] sm:$0xf]
  %v37 = vld [vmem:[%s1 + $0x4c] sm:$0xf]
  %v38 = vld [vmem:[%s1 + $0x50] sm:$0xf]
  %v39 = vld [vmem:[%s1 + $0x54] sm:$0xf]
  %v40 = vld [vmem:[%s1 + $0x58] sm:$0xf]
  %v41 = vld [vmem:[%s1 + $0x5c] sm:$0xf]
  %v42 = vld [vmem:[%s1 + $0x60] sm:$0xf]
  %v43 = vld [vmem:[%s1 + $0x64] sm:$0xf]
  %v44 = vld [vmem:[%s1 + $0x68] sm:$0xf]
  %v45 = vld [vmem:[%s1 + $0x6c] sm:$0xf]
  %v46 = vld [vmem:[%s1 + $0x70] sm:$0xf]
  %v47 = vld [vmem:[%s1 + $0x74] sm:$0xf]
  %v48 = vld [vmem:[%s1 + $0x78] sm:$0xf]
  %v49 = vld [vmem:[%s1 + $0x7c] sm:$0xf]
  %v50 = vld [vmem:[%s1 + $0x80] sm:$0xf]
  %v51 = vld [vmem:[%s1 + $0x84] sm:$0xf]
  %v52 = vld [vmem:[%s1 + $0x88] sm:$0xf]
  %v53 = vld [vmem:[%s1 + $0x8c] sm:$0xf]
  %v54 = vld [vmem:[%s1 + $0x90] sm:$0xf]
  %v55 = vld [vmem:[%s1 + $0x94] sm:$0xf]
  %v56 = vld [vmem:[%s1 + $0x98] sm:$0xf]
  %v57 = vld [vmem:[%s1 + $0x9c] sm:$0xf]
  %v58 = vld [vmem:[%s1 + $0xa0] sm:$0xf]
  %v59 = vld [vmem:[%s1 + $0xa4] sm:$0xf]
  %v60 = vld [vmem:[%s1 + $0xa8] sm:$0xf]
  %v61 = vld [vmem:[%s1 + $0xac] sm:$0xf]
  %v62 = vld [vmem:[%s1 + $0xb0] sm:$0xf]
  %v63 = vld [vmem:[%s1 + $0xb4] sm:$0xf]
  %v64 = vld [vmem:[%s1 + $0xb8] sm:$0xf]
  %v65 = vld [vmem:[%s1 + $0xbc] sm:$0xf]
  %v66 = vld [vmem:[%s1 + $0xc0] sm:$0xf]
  %v67 = vld [vmem:[%s1 + $0xc4] sm:$0xf]
  %v68 = vld [vmem:[%s1 + $0xc8] sm:$0xf]
  %v69 = vld [vmem:[%s1 + $0xcc] sm:$0xf]
  %v70 = vld [vmem:[%s1 + $0xd0] sm:$0xf]
  %v71 = vld [vmem:[%s1 + $0xd4] sm:$0xf]
  %v72 = vld [vmem:[%s1 + $0xd8] sm:$0xf]
  %v73 = vld [vmem:[%s1 + $0xdc] sm:$0xf]
  %v74 = vld [vmem:[%s1 + $0xe0] sm:$0xf]
  %v75 = vld [vmem:[%s1 + $0xe4] sm:$0xf]
  %v76 = vld [vmem:[%s1 + $0xe8] sm:$0xf]
  %v77 = vld [vmem:[%s1 + $0xec] sm:$0xf]
  %v78 = vld [vmem:[%s1 + $0xf0] sm:$0xf]
  %v79 = vld [vmem:[%s1 + $0xf4] sm:$0xf]
  %v80 = vld [vmem:[%s1 + $0xf8] sm:$0xf]
  %v81 = vld [vmem:[%s1 + $0xfc] sm:$0xf]
  %v86 = vunpack.c.l.b16 %v14
  %v87 = vunpack.c.h.b16 %v14
  %v88 = vunpack.c.l.b16 %v15
  %v89 = vunpack.c.h.b16 %v15
  %v90 = vunpack.c.l.b16 %v16
  %v91 = vunpack.c.h.b16 %v16
  %v92 = vunpack.c.l.b16 %v17
  %v93 = vunpack.c.h.b16 %v17
  %v94 = vpack.c.b16 %v90, %v86
  %v95 = vpack.c.b16 %v91, %v87
  %v96 = vpack.c.b16 %v92, %v88
  %v97 = vpack.c.b16 %v93, %v89
  %v166 = vunpack.c.l.b16 %v18
  %v167 = vunpack.c.l.b16 %v19
  %v168 = vunpack.c.l.b16 %v20
  %v169 = vunpack.c.l.b16 %v21
  %v170 = vunpack.c.l.b16 %v22
  %v171 = vunpack.c.l.b16 %v23
  %v172 = vunpack.c.l.b16 %v24
  %v173 = vunpack.c.l.b16 %v25
  %v174 = vunpack.c.l.b16 %v26
  %v175 = vunpack.c.l.b16 %v27
  %v176 = vunpack.c.l.b16 %v28
  %v177 = vunpack.c.l.b16 %v29
  %v178 = vunpack.c.l.b16 %v30
  %v179 = vunpack.c.l.b16 %v31
  %v180 = vunpack.c.l.b16 %v32
  %v181 = vunpack.c.l.b16 %v33
  %v182 = vunpack.c.l.b16 %v34
  %v183 = vunpack.c.l.b16 %v35
  %v184 = vunpack.c.l.b16 %v36
  %v185 = vunpack.c.l.b16 %v37
  %v186 = vunpack.c.l.b16 %v38
  %v187 = vunpack.c.l.b16 %v39
  %v188 = vunpack.c.l.b16 %v40
  %v189 = vunpack.c.l.b16 %v41
  %v190 = vunpack.c.l.b16 %v42
  %v191 = vunpack.c.l.b16 %v43
  %v192 = vunpack.c.l.b16 %v44
  %v193 = vunpack.c.l.b16 %v45
  %v194 = vunpack.c.l.b16 %v46
  %v195 = vunpack.c.l.b16 %v47
  %v196 = vunpack.c.l.b16 %v48
  %v197 = vunpack.c.l.b16 %v49
  %v198 = vunpack.c.l.b16 %v50
  %v199 = vunpack.c.l.b16 %v51
  %v200 = vunpack.c.l.b16 %v52
  %v201 = vunpack.c.l.b16 %v53
  %v202 = vunpack.c.l.b16 %v54
  %v203 = vunpack.c.l.b16 %v55
  %v204 = vunpack.c.l.b16 %v56
  %v205 = vunpack.c.l.b16 %v57
  %v206 = vunpack.c.l.b16 %v58
  %v207 = vunpack.c.l.b16 %v59
  %v208 = vunpack.c.l.b16 %v60
  %v209 = vunpack.c.l.b16 %v61
  %v210 = vunpack.c.l.b16 %v62
  %v211 = vunpack.c.l.b16 %v63
  %v212 = vunpack.c.l.b16 %v64
  %v213 = vunpack.c.l.b16 %v65
  %v214 = vunpack.c.l.b16 %v66
  %v215 = vunpack.c.l.b16 %v67
  %v216 = vunpack.c.l.b16 %v68
  %v217 = vunpack.c.l.b16 %v69
  %v218 = vunpack.c.l.b16 %v70
  %v219 = vunpack.c.l.b16 %v71
  %v220 = vunpack.c.l.b16 %v72
  %v221 = vunpack.c.l.b16 %v73
  %v222 = vunpack.c.l.b16 %v74
  %v223 = vunpack.c.l.b16 %v75
  %v224 = vunpack.c.l.b16 %v76
  %v225 = vunpack.c.l.b16 %v77
  %v226 = vunpack.c.l.b16 %v78
  %v227 = vunpack.c.l.b16 %v79
  %v228 = vunpack.c.l.b16 %v80
  %v229 = vunpack.c.l.b16 %v81
  %v230 = vpack.c.b16 %v167, %v166
  %v231 = vpack.c.b16 %v169, %v168
  %v232 = vpack.c.b16 %v171, %v170
  %v233 = vpack.c.b16 %v173, %v172
  %v234 = vpack.c.b16 %v175, %v174
  %v235 = vpack.c.b16 %v177, %v176
  %v236 = vpack.c.b16 %v179, %v178
  %v237 = vpack.c.b16 %v181, %v180
  %v238 = vpack.c.b16 %v183, %v182
  %v239 = vpack.c.b16 %v185, %v184
  %v240 = vpack.c.b16 %v187, %v186
  %v241 = vpack.c.b16 %v189, %v188
  %v242 = vpack.c.b16 %v191, %v190
  %v243 = vpack.c.b16 %v193, %v192
  %v244 = vpack.c.b16 %v195, %v194
  %v245 = vpack.c.b16 %v197, %v196
  %v246 = vpack.c.b16 %v199, %v198
  %v247 = vpack.c.b16 %v201, %v200
  %v248 = vpack.c.b16 %v203, %v202
  %v249 = vpack.c.b16 %v205, %v204
  %v250 = vpack.c.b16 %v207, %v206
  %v251 = vpack.c.b16 %v209, %v208
  %v252 = vpack.c.b16 %v211, %v210
  %v253 = vpack.c.b16 %v213, %v212
  %v254 = vpack.c.b16 %v215, %v214
  %v255 = vpack.c.b16 %v217, %v216
  %v256 = vpack.c.b16 %v219, %v218
  %v257 = vpack.c.b16 %v221, %v220
  %v258 = vpack.c.b16 %v223, %v222
  %v259 = vpack.c.b16 %v225, %v224
  %v260 = vpack.c.b16 %v227, %v226
  %v261 = vpack.c.b16 %v229, %v228
  %294 = vmatprep.subr.bf16.mxu0 0
  %295 = vmatpush1.bf16.msra.mxu0 %v230
  %296 = vmatprep.subr.bf16.mxu0 0
  %297 = vmatpush1.bf16.msra.mxu0 %v231
  %298 = vmatprep.subr.bf16.mxu0 0
  %299 = vmatpush1.bf16.msra.mxu0 %v232
  %300 = vmatprep.subr.bf16.mxu0 0
  %301 = vmatpush1.bf16.msra.mxu0 %v233
  %302 = vmatprep.subr.bf16.mxu0 0
  %303 = vmatpush1.bf16.msra.mxu0 %v234
  %304 = vmatprep.subr.bf16.mxu0 0
  %305 = vmatpush1.bf16.msra.mxu0 %v235
  %306 = vmatprep.subr.bf16.mxu0 0
  %307 = vmatpush1.bf16.msra.mxu0 %v236
  %308 = vmatprep.subr.bf16.mxu0 0
  %309 = vmatpush1.bf16.msra.mxu0 %v237
  %310 = vmatprep.subr.bf16.mxu0 0
  %311 = vmatpush1.bf16.msra.mxu0 %v238
  %312 = vmatprep.subr.bf16.mxu0 0
  %313 = vmatpush1.bf16.msra.mxu0 %v239
  %314 = vmatprep.subr.bf16.mxu0 0
  %315 = vmatpush1.bf16.msra.mxu0 %v240
  %316 = vmatprep.subr.bf16.mxu0 0
  %317 = vmatpush1.bf16.msra.mxu0 %v241
  %318 = vmatprep.subr.bf16.mxu0 0
  %319 = vmatpush1.bf16.msra.mxu0 %v242
  %320 = vmatprep.subr.bf16.mxu0 0
  %321 = vmatpush1.bf16.msra.mxu0 %v243
  %322 = vmatprep.subr.bf16.mxu0 0
  %323 = vmatpush1.bf16.msra.mxu0 %v244
  %324 = vmatprep.subr.bf16.mxu0 0
  %325 = vmatpush1.bf16.msra.mxu0 %v245
  %326 = vmatprep.mubr.bf16.mxu0 %v95
  %327 = vmatmul.mubr.bf16.gmra.mrb[0].mxu0 %v94
  %v328 = vpop.f32.mrb[0].mxu0
  %v329 = vadd.f32 0.0, %v328
  %v330 = vpop.f32.mrb[0].mxu0
  %v331 = vpop.f32.mrb[0].mxu0
  %v332 = vadd.f32 0.0, %v331
  %v333 = vpop.f32.mrb[0].mxu0
  %334 = vdwg.mxu0
  %335 = vmatprep.subr.bf16.mxu0 0
  %336 = vmatpush1.bf16.msra.mxu0 %v246
  %337 = vmatprep.subr.bf16.mxu0 0
  %338 = vmatpush1.bf16.msra.mxu0 %v247
  %339 = vmatprep.subr.bf16.mxu0 0
  %340 = vmatpush1.bf16.msra.mxu0 %v248
  %341 = vmatprep.subr.bf16.mxu0 0
  %342 = vmatpush1.bf16.msra.mxu0 %v249
  %343 = vmatprep.subr.bf16.mxu0 0
  %344 = vmatpush1.bf16.msra.mxu0 %v250
  %345 = vmatprep.subr.bf16.mxu0 0
  %346 = vmatpush1.bf16.msra.mxu0 %v251
  %347 = vmatprep.subr.bf16.mxu0 0
  %348 = vmatpush1.bf16.msra.mxu0 %v252
  %349 = vmatprep.subr.bf16.mxu0 0
  %350 = vmatpush1.bf16.msra.mxu0 %v253
  %351 = vmatprep.subr.bf16.mxu0 0
  %352 = vmatpush1.bf16.msra.mxu0 %v254
  %353 = vmatprep.subr.bf16.mxu0 0
  %354 = vmatpush1.bf16.msra.mxu0 %v255
  %355 = vmatprep.subr.bf16.mxu0 0
  %356 = vmatpush1.bf16.msra.mxu0 %v256
  %357 = vmatprep.subr.bf16.mxu0 0
  %358 = vmatpush1.bf16.msra.mxu0 %v257
  %359 = vmatprep.subr.bf16.mxu0 0
  %360 = vmatpush1.bf16.msra.mxu0 %v258
  %361 = vmatprep.subr.bf16.mxu0 0
  %362 = vmatpush1.bf16.msra.mxu0 %v259
  %363 = vmatprep.subr.bf16.mxu0 0
  %364 = vmatpush1.bf16.msra.mxu0 %v260
  %365 = vmatprep.subr.bf16.mxu0 0
  %366 = vmatpush1.bf16.msra.mxu0 %v261
  %367 = vmatprep.mubr.bf16.mxu0 %v97
  %368 = vmatmul.mubr.bf16.gmra.mrb[0].mxu0 %v96
  %v369 = vpop.f32.mrb[0].mxu0
  %v370 = vadd.f32 %v329, %v369
  %v371 = vpop.f32.mrb[0].mxu0
  %v372 = vpop.f32.mrb[0].mxu0
  %v373 = vadd.f32 %v332, %v372
  %v374 = vpop.f32.mrb[0].mxu0
  %375 = vdwg.mxu0
  %v376 = vpack.c.bf16 %v373, %v370
  %v378 = vunpack.c.l.b16 %v376
  %v379 = vunpack.c.h.b16 %v376
  %v380 = vpack.c.b16 %v378, %v378
  %v381 = vpack.c.b16 %v379, %v379
  %384 = vst [vmem:[%s2] sm:$0xf] %v380
  %385 = vst [vmem:[%s2 + $0x4] sm:$0xf] %v381
  %v386 = vadd.f32 %v370, %v373
  %v387 = vrot.slane %v386, 4
  %v388 = vadd.f32 %v386, %v387
  %v389 = vrot.slane %v388, 2
  %v390 = vadd.f32 %v388, %v389
  %v391 = vrot.slane %v390, 1
  %v392 = vadd.f32 %v390, %v391
  %v393 = vmul.f32 %v370, %v370
  %v394 = vmul.f32 %v373, %v373
  %v395 = vadd.f32 %v393, %v394
  %v396 = vrot.slane %v395, 4
  %v397 = vadd.f32 %v395, %v396
  %v398 = vrot.slane %v397, 2
  %v399 = vadd.f32 %v397, %v398
  %v400 = vrot.slane %v399, 1
  %v401 = vadd.f32 %v399, %v400
  %vm402 = vcmask 1040384
  %v403 = vsel %vm402, %v392, %v401
  %vm404 = vcmask 1041408
  %v405 = vsel %vm404, %v403, 0.0
  %406 = vst [vmem:[%s3] sm:$0xff] %v405
  // Predicated region
  $region10: #{netd_forward.12} parent=0 // pred_check
    _
  $region11: #{netd_forward.12} parent=0 // pred_check_branch
    %408 = sbr.rel (0) target = $region13
  $region12: #{netd_forward.12} parent=0 // pred_region
    _
  $region13: #{netd_forward.12} parent=0 // pred_fallthru
    _
  // Predicated region
  $region14: #{netd_forward.12} parent=0 // pred_check
    _
  $region15: #{netd_forward.12} parent=0 // pred_check_branch
    %410 = sbr.rel (0) target = $region17
  $region16: #{netd_forward.12} parent=0 // pred_region
    _
  $region17: #{netd_forward.12} parent=0 // pred_fallthru
    _
  // Predicated region
  $region18: #{netd_forward.12} parent=0 // pred_check
    _
  $region19: #{netd_forward.12} parent=0 // pred_check_branch
    %412 = sbr.rel (0) target = $region21
  $region20: #{netd_forward.12} parent=0 // pred_region
    _
  $region21: #{netd_forward.12} parent=0 // pred_fallthru
    _
  // Predicated region
  $region22: #{netd_forward.12} parent=0 // pred_check
    _
  $region23: #{netd_forward.12} parent=0 // pred_check_branch
    %414 = sbr.rel (0) target = $region25
  $region24: #{netd_forward.12} parent=0 // pred_region
    _
  $region25: #{netd_forward.12} parent=0 // pred_fallthru
    _

</llo_original>
